<compile_context>
chip_gen: v7x
topology: tpu7x:2x2x1
jax: 0.10.0
libtpu: 0.0.40
codegen_flags: <defaults>
</compile_context>

<pallas_src>
import functools

import jax
import jax.numpy as jnp
from jax.experimental import pallas as pl
from jax.experimental.pallas import tpu as pltpu


def _mha_kernel(*refs, num_heads, d_k, d_model, scale, mask_mode):
    if mask_mode == "none":
        (q_ref, k_ref, v_ref,
         wq_ref, wk_ref, wv_ref, wo_ref, bo_ref, o_ref, ctx_ref) = refs
        mb_ref = None
    else:
        (q_ref, k_ref, v_ref, mb_ref,
         wq_ref, wk_ref, wv_ref, wo_ref, bo_ref, o_ref, ctx_ref) = refs

    Bt, Sq, Dp = q_ref.shape
    Sk = k_ref.shape[1]

    # --- Q/K/V projections: one big MXU matmul each over the whole batch block (bf16 in,
    #     f32 accumulate). Scale is folded into Q once instead of per-head on scores. ---
    xq = q_ref[...].reshape(Bt * Sq, Dp).astype(jnp.bfloat16)
    xk = k_ref[...].reshape(Bt * Sk, Dp).astype(jnp.bfloat16)
    xv = v_ref[...].reshape(Bt * Sk, Dp).astype(jnp.bfloat16)

    Qb = (jnp.dot(xq, wq_ref[...], preferred_element_type=jnp.float32)
          * scale).astype(jnp.bfloat16)                        # (Bt*Sq, Dp)
    Kb = jnp.dot(xk, wk_ref[...],
                 preferred_element_type=jnp.float32).astype(jnp.bfloat16)
    Vb = jnp.dot(xv, wv_ref[...],
                 preferred_element_type=jnp.float32).astype(jnp.bfloat16)

    # Zero the padded lane tail of the context scratch so stale VMEM (possibly NaN) can't
    # leak through the (zero-padded) W_o rows. Cheap; only when d_model was padded.
    if Dp > d_model:
        ctx_ref[:, d_model:Dp] = jnp.zeros((Bt * Sq, Dp - d_model), jnp.bfloat16)

    if mask_mode == "bcast":
        # Batch-broadcast additive bias: cast once, shared by every batch element.
        neg_b = mb_ref[0].astype(jnp.float32)                  # (Sq, Sk)

    # --- attention: static unroll over (batch-in-block, head); Bt*num_heads kept small.
    #     Each head's (Sq, d_k) context is written straight into the (Bt*Sq, Dp) scratch
    #     at its lane offset (no lane-dim / batch-dim concatenates). ---
    for b in range(Bt):
        q0, k0 = b * Sq, b * Sk
        if mask_mode == "batch":
            # Additive bias, hoisted out of the head loop.
            # (Degenerate fully-masked rows give a softmax over the raw scores rather
            #  than the reference's uniform distribution — both are meaningless outputs.)
            neg = mb_ref[b].astype(jnp.float32)                # (Sq, Sk)
        elif mask_mode == "bcast":
            neg = neg_b
        for h in range(num_heads):
            lo = h * d_k
            Qh = Qb[q0:q0 + Sq, lo:lo + d_k]                   # (Sq, dk) bf16
            Kh = Kb[k0:k0 + Sk, lo:lo + d_k]                   # (Sk, dk) bf16
            Vh = Vb[k0:k0 + Sk, lo:lo + d_k]                   # (Sk, dk) bf16

            # NT form (contract the d_k lane dim of both operands) — the MXU-native layout
            # used by the reference flash kernels; no explicit K transpose materialized.
            s = jax.lax.dot_general(                           # (Sq, Sk) f32
                Qh, Kh, (((1,), (1,)), ((), ())),
                preferred_element_type=jnp.float32)
            if mask_mode != "none":
                s = s + neg

            # numerically stable softmax over keys (f32 math — safe on v5e)
            s = s - jnp.max(s, axis=-1, keepdims=True)
            e = jnp.exp(s)
            attn = (e * pl.reciprocal(jnp.sum(e, axis=-1, keepdims=True),
                                      approx=True)).astype(jnp.bfloat16)

            ctx_ref[q0:q0 + Sq, lo:lo + d_k] = jnp.dot(
                attn, Vh, preferred_element_type=jnp.float32).astype(jnp.bfloat16)

    # --- single full-width output projection + bias (bias broadcast happens once) ---
    out = (jnp.dot(ctx_ref[...], wo_ref[...], preferred_element_type=jnp.float32)
           + bo_ref[...])
    o_ref[...] = out.reshape(Bt, Sq, Dp).astype(o_ref.dtype)


def _round_up(x, m):
    return (x + m - 1) // m * m


def _vmem_capacity_bytes():
    """Per-generation VMEM capacity (v5e/v6e: 128 MiB, v7x: 64 MiB per core)."""
    try:
        return int(pltpu.get_tpu_info().vmem_capacity_bytes)
    except Exception:
        pass
    try:
        kind = jax.devices()[0].device_kind.lower()
        return (64 << 20) if "v7" in kind else (128 << 20)
    except Exception:
        return 64 << 20


def _row_cap():
    """Rows of the batched projection per grid step: 512 amortizes weight holds on the
    256x256 MXU (v6e/v7x); 256 is enough for v5e's 128x128 MXU."""
    try:
        kind = jax.devices()[0].device_kind.lower()
    except Exception:
        return 256
    return 512 if ("v6" in kind or "v7" in kind) else 256


def _vmem_estimate(Bt, Sq, Sk, Dp, act_bytes, out_bytes, mask_mode):
    """Rough per-step VMEM bytes for a candidate batch block Bt."""
    est = 2 * (Bt * Sq * Dp + 2 * Bt * Sk * Dp) * act_bytes    # q/k/v blocks, double-buffered
    est += 4 * Dp * Dp * 2 + Dp * 4                            # weights + bias, Buffered(1)
    est += 2 * Bt * Sq * Dp * out_bytes                        # output block, double-buffered
    if mask_mode == "batch":
        est += 2 * Bt * Sq * Sk * 2                            # per-batch additive bias (bf16)
    elif mask_mode == "bcast":
        est += Sq * Sk * 2                                     # shared bias, Buffered(1)
    est += Bt * Sq * Dp * 2                                    # ctx scratch (bf16)
    est += (Bt * Sq + 2 * Bt * Sk) * Dp * (4 + 2 + act_bytes)  # projected Q/K/V f32+bf16 + casts
    est += Bt * Sq * Sk * 8                                    # scores / exp temporaries
    est += Bt * Sq * Dp * 4                                    # pre-store f32 output
    return est + (4 << 20)                                     # slack


def _choose_batch_block(B, Sq, Sk, Dp, num_heads, act_bytes, out_bytes,
                        mask_mode, budget, row_cap):
    """Largest divisor of B that fits the VMEM budget and the unroll/row caps, preferring
    to keep >= 2 grid steps (megacore / 2 TCs on v7x)."""
    best = 1
    for c in range(1, B + 1):
        if B % c:
            continue
        if c * num_heads > 32 or c * Sq > row_cap:
            break
        if _vmem_estimate(c, Sq, Sk, Dp, act_bytes, out_bytes, mask_mode) > budget:
            break
        best = c
    if B // best < 2:
        for c in range(best - 1, 0, -1):
            if B % c == 0 and B // c >= 2:
                best = c
                break
    return best


def multi_head_attention(query, key, value, params, mask=None, *, num_heads):
    """query/key/value: (B, S, d_model) float32. mask: (B,Sq,Sk), (1,Sq,Sk) or (Sq,Sk).
    Returns (B, Sq, d_model) float32."""
    B, Sq, D = query.shape
    Sk = key.shape[1]
    assert D % num_heads == 0
    d_k = D // num_heads
    scale = float(d_k) ** -0.5
    Dp = _round_up(D, 128)                                  # lane-dense padding
    padded = Dp > D

    # --- mask handling ---------------------------------------------------------------
    if mask is None:
        mask_mode = "none"
        mbias = None
    else:
        m = jnp.asarray(mask)
        if m.ndim == 2:
            m = m[None]
        mask_mode = "bcast" if m.shape[0] == 1 else "batch"
        if mask_mode == "batch":
            assert m.shape[0] == B
        # Pre-additive bf16 bias (0 where kept, -1e9 where masked): half the HBM bytes of
        # an f32 mask and no compare/select per head inside the kernel.
        mbias = jnp.where(m == 0, jnp.float32(-1e9), jnp.float32(0.0)).astype(jnp.bfloat16)

    # --- activations / weights -------------------------------------------------------
    def prep_act(x):
        # When padding is needed, fuse pad + bf16 cast in the wrapper (one XLA pass).
        # When D is already lane-dense, feed f32 directly and cast inside the kernel
        # (saves a separate HBM read/write pass; cast hides under the MXU projections).
        if padded:
            return jnp.pad(x, ((0, 0), (0, 0), (0, Dp - D))).astype(jnp.bfloat16)
        return x

    def pad_w(w):
        if padded:
            w = jnp.pad(w, ((0, Dp - D), (0, Dp - D)))
        return w.astype(jnp.bfloat16)

    q = prep_act(query)
    k = prep_act(key)
    v = prep_act(value)
    wq = pad_w(params["wq_t"])
    wk = pad_w(params["wk_t"])
    wv = pad_w(params["wv_t"])
    wo = pad_w(params["wo_t"])
    bo = params["b_o"].reshape(1, D).astype(jnp.float32)
    if padded:
        bo = jnp.pad(bo, ((0, 0), (0, Dp - D)))

    act_bytes = 2 if padded else 4
    # Padded outputs are emitted bf16 (the slice back to d_model has to copy anyway);
    # unpadded outputs stay f32 so no extra cast pass is needed.
    out_dtype = jnp.bfloat16 if padded else jnp.float32
    out_bytes = 2 if padded else 4

    # --- per-generation VMEM budget and batch block ----------------------------------
    cap = _vmem_capacity_bytes()
    budget = max(16 << 20, min(cap - (16 << 20), int(cap * 0.85)))
    Bt = _choose_batch_block(B, Sq, Sk, Dp, num_heads, act_bytes, out_bytes,
                             mask_mode, budget, _row_cap())
    grid = (B // Bt,)
    vmem_limit = int(min(budget,
                         max(32 << 20,
                             _vmem_estimate(Bt, Sq, Sk, Dp, act_bytes, out_bytes,
                                            mask_mode))))

    kernel = functools.partial(_mha_kernel, num_heads=num_heads, d_k=d_k,
                               d_model=D, scale=scale, mask_mode=mask_mode)

    resident = dict(pipeline_mode=pl.Buffered(1))           # DMA'd once, never revisited
    in_specs = [
        pl.BlockSpec((Bt, Sq, Dp), lambda b: (b, 0, 0)),     # query
        pl.BlockSpec((Bt, Sk, Dp), lambda b: (b, 0, 0)),     # key
        pl.BlockSpec((Bt, Sk, Dp), lambda b: (b, 0, 0)),     # value
    ]
    operands = [q, k, v]
    if mask_mode == "batch":
        in_specs.append(pl.BlockSpec((Bt, Sq, Sk), lambda b: (b, 0, 0)))
        operands.append(mbias)
    elif mask_mode == "bcast":
        in_specs.append(pl.BlockSpec((1, Sq, Sk), lambda b: (0, 0, 0), **resident))
        operands.append(mbias)
    in_specs += [
        pl.BlockSpec((Dp, Dp), lambda b: (0, 0), **resident),  # W_q^T
        pl.BlockSpec((Dp, Dp), lambda b: (0, 0), **resident),  # W_k^T
        pl.BlockSpec((Dp, Dp), lambda b: (0, 0), **resident),  # W_v^T
        pl.BlockSpec((Dp, Dp), lambda b: (0, 0), **resident),  # W_o^T
        pl.BlockSpec((1, Dp), lambda b: (0, 0), **resident),   # b_o
    ]
    operands += [wq, wk, wv, wo, bo]

    out = pl.pallas_call(
        kernel,
        out_shape=jax.ShapeDtypeStruct((B, Sq, Dp), out_dtype),
        grid_spec=pltpu.PrefetchScalarGridSpec(
            num_scalar_prefetch=0,
            grid=grid,
            in_specs=in_specs,
            out_specs=pl.BlockSpec((Bt, Sq, Dp), lambda b: (b, 0, 0)),
            scratch_shapes=[pltpu.VMEM((Bt * Sq, Dp), jnp.bfloat16)],  # per-step context
        ),
        compiler_params=pltpu.CompilerParams(
            dimension_semantics=("parallel",),
            vmem_limit_bytes=vmem_limit,
        ),
    )(*operands)

    if padded:
        out = out[:, :, :D].astype(jnp.float32)
    return out


def _xavier_uniform(key, shape):
    fan_in, fan_out = shape[1], shape[0]          # nn.Linear weight is (out, in)
    bound = (6.0 / (fan_in + fan_out)) ** 0.5
    return jax.random.uniform(key, shape, jnp.float32, -bound, bound)


def _reference_mha(query, key, value, params, num_heads, mask=None):
    """Pure-JAX f32 reference mirroring the PyTorch module (eval mode)."""
    B, Sq, D = query.shape
    Sk = key.shape[1]
    d_k = D // num_heads
    Q = (query @ params["wq_t"]).reshape(B, Sq, num_heads, d_k).transpose(0, 2, 1, 3)
    K = (key @ params["wk_t"]).reshape(B, Sk, num_heads, d_k).transpose(0, 2, 1, 3)
    V = (value @ params["wv_t"]).reshape(B, Sk, num_heads, d_k).transpose(0, 2, 1, 3)
    scores = jnp.einsum("bhqd,bhkd->bhqk", Q, K) * (d_k ** -0.5)
    if mask is not None:
        scores = jnp.where(mask[:, None, :, :] == 0, -1e9, scores)
    attn = jax.nn.softmax(scores, axis=-1)
    ctx = jnp.einsum("bhqk,bhkd->bhqd", attn, V)
    ctx = ctx.transpose(0, 2, 1, 3).reshape(B, Sq, D)
    return ctx @ params["wo_t"] + params["b_o"]


if __name__ == "__main__":
    # Small shapes consistent with the module: batch=2, seq=8, d_model=32, heads=4.
    B, S, D, H = 2, 8, 32, 4

    root = jax.random.PRNGKey(0)
    kq, kk, kv, ko, kx1, kx2, kx3 = jax.random.split(root, 7)

    # nn.Linear weights are (out_features, in_features); store the transpose.
    params = {
        "wq_t": _xavier_uniform(kq, (D, D)).T,
        "wk_t": _xavier_uniform(kk, (D, D)).T,
        "wv_t": _xavier_uniform(kv, (D, D)).T,
        "wo_t": _xavier_uniform(ko, (D, D)).T,
        "b_o":  jnp.zeros((D,), jnp.float32),
    }

    query = jax.random.normal(kx1, (B, S, D), jnp.float32)
    key   = jax.random.normal(kx2, (B, S, D), jnp.float32)
    value = jax.random.normal(kx3, (B, S, D), jnp.float32)

    # --- no mask ---
    out = multi_head_attention(query, key, value, params, mask=None, num_heads=H)
    out = jax.block_until_ready(out)
    ref = _reference_mha(query, key, value, params, H, mask=None)
    assert out.shape == (B, S, D)
    # bf16 MXU operands (f32 accumulation) => slightly looser tolerance than pure f32.
    assert jnp.allclose(out, ref, atol=5e-2, rtol=5e-2), "no-mask mismatch vs reference"

    # --- causal mask, full (B, Sq, Sk) form (module spec) ---
    causal = jnp.tril(jnp.ones((S, S), jnp.float32))
    mask3 = jnp.broadcast_to(causal, (B, S, S))
    out_m = multi_head_attention(query, key, value, params, mask=mask3, num_heads=H)
    out_m = jax.block_until_ready(out_m)
    ref_m = _reference_mha(query, key, value, params, H, mask=mask3)
    assert jnp.allclose(out_m, ref_m, atol=5e-2, rtol=5e-2), "masked mismatch vs reference"

    # --- causal mask, batch-broadcast (2-D) form: exercises the resident-bias path ---
    out_b = multi_head_attention(query, key, value, params, mask=causal, num_heads=H)
    out_b = jax.block_until_ready(out_b)
    assert jnp.allclose(out_b, ref_m, atol=5e-2, rtol=5e-2), "broadcast-mask mismatch"

    print("KERNEL_OK")
</pallas_src>

<mosaic_0001>
module attributes {stable_mosaic.version = 11 : i64} {
  func.func @_mha_kernel(%arg0: i32, %arg1: memref<1x8x128xbf16, #tpu.memory_space<vmem>>, %arg2: memref<1x8x128xbf16, #tpu.memory_space<vmem>>, %arg3: memref<1x8x128xbf16, #tpu.memory_space<vmem>>, %arg4: memref<128x128xbf16, #tpu.memory_space<vmem>>, %arg5: memref<128x128xbf16, #tpu.memory_space<vmem>>, %arg6: memref<128x128xbf16, #tpu.memory_space<vmem>>, %arg7: memref<128x128xbf16, #tpu.memory_space<vmem>>, %arg8: memref<1x128xf32, #tpu.memory_space<vmem>>, %arg9: memref<1x8x128xbf16, #tpu.memory_space<vmem>>, %arg10: memref<8x128xbf16, #tpu.memory_space<vmem>>) attributes {dimension_semantics = [#tpu.dimension_semantics<parallel>], iteration_bounds = array<i64: 2>, scalar_prefetch = 0 : i64, scratch_operands = 1 : i64, tpu.core_type = #tpu.core_type<tc>, window_params = [{transform_indices = @transform_0, window_bounds = array<i64: 1, 8, 128>}, {transform_indices = @transform_1, window_bounds = array<i64: 1, 8, 128>}, {transform_indices = @transform_2, window_bounds = array<i64: 1, 8, 128>}, {pipeline_mode = #tpu.pipeline_mode<synchronous>, transform_indices = @transform_3, window_bounds = array<i64: 128, 128>}, {pipeline_mode = #tpu.pipeline_mode<synchronous>, transform_indices = @transform_4, window_bounds = array<i64: 128, 128>}, {pipeline_mode = #tpu.pipeline_mode<synchronous>, transform_indices = @transform_5, window_bounds = array<i64: 128, 128>}, {pipeline_mode = #tpu.pipeline_mode<synchronous>, transform_indices = @transform_6, window_bounds = array<i64: 128, 128>}, {pipeline_mode = #tpu.pipeline_mode<synchronous>, transform_indices = @transform_7, window_bounds = array<i64: 1, 128>}, {transform_indices = @transform_8, window_bounds = array<i64: 1, 8, 128>}]} {
    %c0 = arith.constant 0 : index
    %c0_0 = arith.constant 0 : index
    %c0_1 = arith.constant 0 : index
    %0 = vector.load %arg1[%c0, %c0_0, %c0_1] : memref<1x8x128xbf16, #tpu.memory_space<vmem>>, vector<1x8x128xbf16>
    %1 = vector.shape_cast %0 : vector<1x8x128xbf16> to vector<8x128xbf16>
    %c0_2 = arith.constant 0 : index
    %c0_3 = arith.constant 0 : index
    %c0_4 = arith.constant 0 : index
    %2 = vector.load %arg2[%c0_2, %c0_3, %c0_4] : memref<1x8x128xbf16, #tpu.memory_space<vmem>>, vector<1x8x128xbf16>
    %3 = vector.shape_cast %2 : vector<1x8x128xbf16> to vector<8x128xbf16>
    %c0_5 = arith.constant 0 : index
    %c0_6 = arith.constant 0 : index
    %c0_7 = arith.constant 0 : index
    %4 = vector.load %arg3[%c0_5, %c0_6, %c0_7] : memref<1x8x128xbf16, #tpu.memory_space<vmem>>, vector<1x8x128xbf16>
    %5 = vector.shape_cast %4 : vector<1x8x128xbf16> to vector<8x128xbf16>
    %c0_8 = arith.constant 0 : index
    %c0_9 = arith.constant 0 : index
    %6 = vector.load %arg4[%c0_8, %c0_9] : memref<128x128xbf16, #tpu.memory_space<vmem>>, vector<128x128xbf16>
    %cst = arith.constant dense<0.000000e+00> : vector<8x128xf32>
    %7 = tpu.matmul %1, %6, %cst {dimension_numbers = #tpu.dot_dimension_numbers<[1], [0], [0], [1], [0, 0, 1, 1], [], []>} : vector<8x128xbf16>, vector<128x128xbf16>, vector<8x128xf32> -> vector<8x128xf32>
    %cst_10 = arith.constant 0.353553385 : f32
    %8 = vector.broadcast %cst_10 : f32 to vector<8x128xf32>
    %9 = arith.mulf %7, %8 : vector<8x128xf32>
    %10 = arith.truncf %9 : vector<8x128xf32> to vector<8x128xbf16>
    %c0_11 = arith.constant 0 : index
    %c0_12 = arith.constant 0 : index
    %11 = vector.load %arg5[%c0_11, %c0_12] : memref<128x128xbf16, #tpu.memory_space<vmem>>, vector<128x128xbf16>
    %cst_13 = arith.constant dense<0.000000e+00> : vector<8x128xf32>
    %12 = tpu.matmul %3, %11, %cst_13 {dimension_numbers = #tpu.dot_dimension_numbers<[1], [0], [0], [1], [0, 0, 1, 1], [], []>} : vector<8x128xbf16>, vector<128x128xbf16>, vector<8x128xf32> -> vector<8x128xf32>
    %13 = arith.truncf %12 : vector<8x128xf32> to vector<8x128xbf16>
    %c0_14 = arith.constant 0 : index
    %c0_15 = arith.constant 0 : index
    %14 = vector.load %arg6[%c0_14, %c0_15] : memref<128x128xbf16, #tpu.memory_space<vmem>>, vector<128x128xbf16>
    %cst_16 = arith.constant dense<0.000000e+00> : vector<8x128xf32>
    %15 = tpu.matmul %5, %14, %cst_16 {dimension_numbers = #tpu.dot_dimension_numbers<[1], [0], [0], [1], [0, 0, 1, 1], [], []>} : vector<8x128xbf16>, vector<128x128xbf16>, vector<8x128xf32> -> vector<8x128xf32>
    %16 = arith.truncf %15 : vector<8x128xf32> to vector<8x128xbf16>
    %cst_17 = arith.constant 0.000000e+00 : bf16
    %17 = vector.broadcast %cst_17 : bf16 to vector<8x96xbf16>
    %c0_18 = arith.constant 0 : index
    %c32 = arith.constant 32 : index
    %18 = vector.load %arg10[%c0_18, %c32] : memref<8x128xbf16, #tpu.memory_space<vmem>>, vector<8x96xbf16>
    tpu.vector_store %arg10[%c0_18, %c32], %17 {strides = array<i32>} : memref<8x128xbf16, #tpu.memory_space<vmem>>, vector<8x96xbf16>,
    %19 = vector.extract_strided_slice %10 {offsets = [0, 0], sizes = [8, 8], strides = [1, 1]} : vector<8x128xbf16> to vector<8x8xbf16>
    %20 = vector.extract_strided_slice %13 {offsets = [0, 0], sizes = [8, 8], strides = [1, 1]} : vector<8x128xbf16> to vector<8x8xbf16>
    %21 = vector.extract_strided_slice %16 {offsets = [0, 0], sizes = [8, 8], strides = [1, 1]} : vector<8x128xbf16> to vector<8x8xbf16>
    %cst_19 = arith.constant dense<0.000000e+00> : vector<8x8xf32>
    %22 = tpu.matmul %19, %20, %cst_19 {dimension_numbers = #tpu.dot_dimension_numbers<[1], [1], [0], [0], [0, 0, 1, 0], [], []>} : vector<8x8xbf16>, vector<8x8xbf16>, vector<8x8xf32> -> vector<8x8xf32>
    %cst_20 = arith.constant dense<0xFF800000> : vector<8xf32>
    %23 = vector.multi_reduction <maximumf>, %22, %cst_20 [1] : vector<8x8xf32> to vector<8xf32>
    %24 = vector.shape_cast %23 : vector<8xf32> to vector<8x1xf32>
    %25 = vector.broadcast %24 : vector<8x1xf32> to vector<8x8xf32>
    %26 = arith.subf %22, %25 : vector<8x8xf32>
    %27 = math.exp %26 : vector<8x8xf32>
    %cst_21 = arith.constant dense<0.000000e+00> : vector<8xf32>
    %28 = vector.multi_reduction <add>, %27, %cst_21 [1] : vector<8x8xf32> to vector<8xf32>
    %29 = vector.shape_cast %28 : vector<8xf32> to vector<8x1xf32>
    %30 = tpu.reciprocal %29 {approx = true} : vector<8x1xf32> -> vector<8x1xf32>
    %31 = vector.broadcast %30 : vector<8x1xf32> to vector<8x8xf32>
    %32 = arith.mulf %27, %31 : vector<8x8xf32>
    %33 = arith.truncf %32 : vector<8x8xf32> to vector<8x8xbf16>
    %cst_22 = arith.constant dense<0.000000e+00> : vector<8x8xf32>
    %34 = tpu.matmul %33, %21, %cst_22 {dimension_numbers = #tpu.dot_dimension_numbers<[1], [0], [0], [1], [0, 0, 1, 1], [], []>} : vector<8x8xbf16>, vector<8x8xbf16>, vector<8x8xf32> -> vector<8x8xf32>
    %35 = arith.truncf %34 : vector<8x8xf32> to vector<8x8xbf16>
    %c0_23 = arith.constant 0 : index
    %c0_24 = arith.constant 0 : index
    %36 = vector.load %arg10[%c0_23, %c0_24] : memref<8x128xbf16, #tpu.memory_space<vmem>>, vector<8x8xbf16>
    tpu.vector_store %arg10[%c0_23, %c0_24], %35 {strides = array<i32>} : memref<8x128xbf16, #tpu.memory_space<vmem>>, vector<8x8xbf16>,
    %37 = vector.extract_strided_slice %10 {offsets = [0, 8], sizes = [8, 8], strides = [1, 1]} : vector<8x128xbf16> to vector<8x8xbf16>
    %38 = vector.extract_strided_slice %13 {offsets = [0, 8], sizes = [8, 8], strides = [1, 1]} : vector<8x128xbf16> to vector<8x8xbf16>
    %39 = vector.extract_strided_slice %16 {offsets = [0, 8], sizes = [8, 8], strides = [1, 1]} : vector<8x128xbf16> to vector<8x8xbf16>
    %cst_25 = arith.constant dense<0.000000e+00> : vector<8x8xf32>
    %40 = tpu.matmul %37, %38, %cst_25 {dimension_numbers = #tpu.dot_dimension_numbers<[1], [1], [0], [0], [0, 0, 1, 0], [], []>} : vector<8x8xbf16>, vector<8x8xbf16>, vector<8x8xf32> -> vector<8x8xf32>
    %cst_26 = arith.constant dense<0xFF800000> : vector<8xf32>
    %41 = vector.multi_reduction <maximumf>, %40, %cst_26 [1] : vector<8x8xf32> to vector<8xf32>
    %42 = vector.shape_cast %41 : vector<8xf32> to vector<8x1xf32>
    %43 = vector.broadcast %42 : vector<8x1xf32> to vector<8x8xf32>
    %44 = arith.subf %40, %43 : vector<8x8xf32>
    %45 = math.exp %44 : vector<8x8xf32>
    %cst_27 = arith.constant dense<0.000000e+00> : vector<8xf32>
    %46 = vector.multi_reduction <add>, %45, %cst_27 [1] : vector<8x8xf32> to vector<8xf32>
    %47 = vector.shape_cast %46 : vector<8xf32> to vector<8x1xf32>
    %48 = tpu.reciprocal %47 {approx = true} : vector<8x1xf32> -> vector<8x1xf32>
    %49 = vector.broadcast %48 : vector<8x1xf32> to vector<8x8xf32>
    %50 = arith.mulf %45, %49 : vector<8x8xf32>
    %51 = arith.truncf %50 : vector<8x8xf32> to vector<8x8xbf16>
    %cst_28 = arith.constant dense<0.000000e+00> : vector<8x8xf32>
    %52 = tpu.matmul %51, %39, %cst_28 {dimension_numbers = #tpu.dot_dimension_numbers<[1], [0], [0], [1], [0, 0, 1, 1], [], []>} : vector<8x8xbf16>, vector<8x8xbf16>, vector<8x8xf32> -> vector<8x8xf32>
    %53 = arith.truncf %52 : vector<8x8xf32> to vector<8x8xbf16>
    %c0_29 = arith.constant 0 : index
    %c8 = arith.constant 8 : index
    %54 = vector.load %arg10[%c0_29, %c8] : memref<8x128xbf16, #tpu.memory_space<vmem>>, vector<8x8xbf16>
    tpu.vector_store %arg10[%c0_29, %c8], %53 {strides = array<i32>} : memref<8x128xbf16, #tpu.memory_space<vmem>>, vector<8x8xbf16>,
    %55 = vector.extract_strided_slice %10 {offsets = [0, 16], sizes = [8, 8], strides = [1, 1]} : vector<8x128xbf16> to vector<8x8xbf16>
    %56 = vector.extract_strided_slice %13 {offsets = [0, 16], sizes = [8, 8], strides = [1, 1]} : vector<8x128xbf16> to vector<8x8xbf16>
    %57 = vector.extract_strided_slice %16 {offsets = [0, 16], sizes = [8, 8], strides = [1, 1]} : vector<8x128xbf16> to vector<8x8xbf16>
    %cst_30 = arith.constant dense<0.000000e+00> : vector<8x8xf32>
    %58 = tpu.matmul %55, %56, %cst_30 {dimension_numbers = #tpu.dot_dimension_numbers<[1], [1], [0], [0], [0, 0, 1, 0], [], []>} : vector<8x8xbf16>, vector<8x8xbf16>, vector<8x8xf32> -> vector<8x8xf32>
    %cst_31 = arith.constant dense<0xFF800000> : vector<8xf32>
    %59 = vector.multi_reduction <maximumf>, %58, %cst_31 [1] : vector<8x8xf32> to vector<8xf32>
    %60 = vector.shape_cast %59 : vector<8xf32> to vector<8x1xf32>
    %61 = vector.broadcast %60 : vector<8x1xf32> to vector<8x8xf32>
    %62 = arith.subf %58, %61 : vector<8x8xf32>
    %63 = math.exp %62 : vector<8x8xf32>
    %cst_32 = arith.constant dense<0.000000e+00> : vector<8xf32>
    %64 = vector.multi_reduction <add>, %63, %cst_32 [1] : vector<8x8xf32> to vector<8xf32>
    %65 = vector.shape_cast %64 : vector<8xf32> to vector<8x1xf32>
    %66 = tpu.reciprocal %65 {approx = true} : vector<8x1xf32> -> vector<8x1xf32>
    %67 = vector.broadcast %66 : vector<8x1xf32> to vector<8x8xf32>
    %68 = arith.mulf %63, %67 : vector<8x8xf32>
    %69 = arith.truncf %68 : vector<8x8xf32> to vector<8x8xbf16>
    %cst_33 = arith.constant dense<0.000000e+00> : vector<8x8xf32>
    %70 = tpu.matmul %69, %57, %cst_33 {dimension_numbers = #tpu.dot_dimension_numbers<[1], [0], [0], [1], [0, 0, 1, 1], [], []>} : vector<8x8xbf16>, vector<8x8xbf16>, vector<8x8xf32> -> vector<8x8xf32>
    %71 = arith.truncf %70 : vector<8x8xf32> to vector<8x8xbf16>
    %c0_34 = arith.constant 0 : index
    %c16 = arith.constant 16 : index
    %72 = vector.load %arg10[%c0_34, %c16] : memref<8x128xbf16, #tpu.memory_space<vmem>>, vector<8x8xbf16>
    tpu.vector_store %arg10[%c0_34, %c16], %71 {strides = array<i32>} : memref<8x128xbf16, #tpu.memory_space<vmem>>, vector<8x8xbf16>,
    %73 = vector.extract_strided_slice %10 {offsets = [0, 24], sizes = [8, 8], strides = [1, 1]} : vector<8x128xbf16> to vector<8x8xbf16>
    %74 = vector.extract_strided_slice %13 {offsets = [0, 24], sizes = [8, 8], strides = [1, 1]} : vector<8x128xbf16> to vector<8x8xbf16>
    %75 = vector.extract_strided_slice %16 {offsets = [0, 24], sizes = [8, 8], strides = [1, 1]} : vector<8x128xbf16> to vector<8x8xbf16>
    %cst_35 = arith.constant dense<0.000000e+00> : vector<8x8xf32>
    %76 = tpu.matmul %73, %74, %cst_35 {dimension_numbers = #tpu.dot_dimension_numbers<[1], [1], [0], [0], [0, 0, 1, 0], [], []>} : vector<8x8xbf16>, vector<8x8xbf16>, vector<8x8xf32> -> vector<8x8xf32>
    %cst_36 = arith.constant dense<0xFF800000> : vector<8xf32>
    %77 = vector.multi_reduction <maximumf>, %76, %cst_36 [1] : vector<8x8xf32> to vector<8xf32>
    %78 = vector.shape_cast %77 : vector<8xf32> to vector<8x1xf32>
    %79 = vector.broadcast %78 : vector<8x1xf32> to vector<8x8xf32>
    %80 = arith.subf %76, %79 : vector<8x8xf32>
    %81 = math.exp %80 : vector<8x8xf32>
    %cst_37 = arith.constant dense<0.000000e+00> : vector<8xf32>
    %82 = vector.multi_reduction <add>, %81, %cst_37 [1] : vector<8x8xf32> to vector<8xf32>
    %83 = vector.shape_cast %82 : vector<8xf32> to vector<8x1xf32>
    %84 = tpu.reciprocal %83 {approx = true} : vector<8x1xf32> -> vector<8x1xf32>
    %85 = vector.broadcast %84 : vector<8x1xf32> to vector<8x8xf32>
    %86 = arith.mulf %81, %85 : vector<8x8xf32>
    %87 = arith.truncf %86 : vector<8x8xf32> to vector<8x8xbf16>
    %cst_38 = arith.constant dense<0.000000e+00> : vector<8x8xf32>
    %88 = tpu.matmul %87, %75, %cst_38 {dimension_numbers = #tpu.dot_dimension_numbers<[1], [0], [0], [1], [0, 0, 1, 1], [], []>} : vector<8x8xbf16>, vector<8x8xbf16>, vector<8x8xf32> -> vector<8x8xf32>
    %89 = arith.truncf %88 : vector<8x8xf32> to vector<8x8xbf16>
    %c0_39 = arith.constant 0 : index
    %c24 = arith.constant 24 : index
    %90 = vector.load %arg10[%c0_39, %c24] : memref<8x128xbf16, #tpu.memory_space<vmem>>, vector<8x8xbf16>
    tpu.vector_store %arg10[%c0_39, %c24], %89 {strides = array<i32>} : memref<8x128xbf16, #tpu.memory_space<vmem>>, vector<8x8xbf16>,
    %c0_40 = arith.constant 0 : index
    %c0_41 = arith.constant 0 : index
    %91 = vector.load %arg10[%c0_40, %c0_41] : memref<8x128xbf16, #tpu.memory_space<vmem>>, vector<8x128xbf16>
    %c0_42 = arith.constant 0 : index
    %c0_43 = arith.constant 0 : index
    %92 = vector.load %arg7[%c0_42, %c0_43] : memref<128x128xbf16, #tpu.memory_space<vmem>>, vector<128x128xbf16>
    %cst_44 = arith.constant dense<0.000000e+00> : vector<8x128xf32>
    %93 = tpu.matmul %91, %92, %cst_44 {dimension_numbers = #tpu.dot_dimension_numbers<[1], [0], [0], [1], [0, 0, 1, 1], [], []>} : vector<8x128xbf16>, vector<128x128xbf16>, vector<8x128xf32> -> vector<8x128xf32>
    %c0_45 = arith.constant 0 : index
    %c0_46 = arith.constant 0 : index
    %94 = vector.load %arg8[%c0_45, %c0_46] : memref<1x128xf32, #tpu.memory_space<vmem>>, vector<1x128xf32>
    %95 = vector.broadcast %94 : vector<1x128xf32> to vector<8x128xf32>
    %96 = arith.addf %93, %95 : vector<8x128xf32>
    %97 = vector.shape_cast %96 : vector<8x128xf32> to vector<1x8x128xf32>
    %98 = arith.truncf %97 : vector<1x8x128xf32> to vector<1x8x128xbf16>
    %c0_47 = arith.constant 0 : index
    %c0_48 = arith.constant 0 : index
    %c0_49 = arith.constant 0 : index
    %99 = vector.load %arg9[%c0_47, %c0_48, %c0_49] : memref<1x8x128xbf16, #tpu.memory_space<vmem>>, vector<1x8x128xbf16>
    tpu.vector_store %arg9[%c0_47, %c0_48, %c0_49], %98 {strides = array<i32>} : memref<1x8x128xbf16, #tpu.memory_space<vmem>>, vector<1x8x128xbf16>,
    return
  }
  func.func @transform_0(%arg0: i32) -> (i32, i32, i32) {
    %c0_i32 = arith.constant 0 : i32
    %c0_i32_0 = arith.constant 0 : i32
    %c0_i32_1 = arith.constant 0 : i32
    return %arg0, %c0_i32, %c0_i32_0 : i32, i32, i32
  }
  func.func @transform_1(%arg0: i32) -> (i32, i32, i32) {
    %c0_i32 = arith.constant 0 : i32
    %c0_i32_0 = arith.constant 0 : i32
    %c0_i32_1 = arith.constant 0 : i32
    return %arg0, %c0_i32, %c0_i32_0 : i32, i32, i32
  }
  func.func @transform_2(%arg0: i32) -> (i32, i32, i32) {
    %c0_i32 = arith.constant 0 : i32
    %c0_i32_0 = arith.constant 0 : i32
    %c0_i32_1 = arith.constant 0 : i32
    return %arg0, %c0_i32, %c0_i32_0 : i32, i32, i32
  }
  func.func @transform_3(%arg0: i32) -> (i32, i32) {
    %c0_i32 = arith.constant 0 : i32
    %c0_i32_0 = arith.constant 0 : i32
    %c0_i32_1 = arith.constant 0 : i32
    return %c0_i32, %c0_i32_0 : i32, i32
  }
  func.func @transform_4(%arg0: i32) -> (i32, i32) {
    %c0_i32 = arith.constant 0 : i32
    %c0_i32_0 = arith.constant 0 : i32
    %c0_i32_1 = arith.constant 0 : i32
    return %c0_i32, %c0_i32_0 : i32, i32
  }
  func.func @transform_5(%arg0: i32) -> (i32, i32) {
    %c0_i32 = arith.constant 0 : i32
    %c0_i32_0 = arith.constant 0 : i32
    %c0_i32_1 = arith.constant 0 : i32
    return %c0_i32, %c0_i32_0 : i32, i32
  }
  func.func @transform_6(%arg0: i32) -> (i32, i32) {
    %c0_i32 = arith.constant 0 : i32
    %c0_i32_0 = arith.constant 0 : i32
    %c0_i32_1 = arith.constant 0 : i32
    return %c0_i32, %c0_i32_0 : i32, i32
  }
  func.func @transform_7(%arg0: i32) -> (i32, i32) {
    %c0_i32 = arith.constant 0 : i32
    %c0_i32_0 = arith.constant 0 : i32
    %c0_i32_1 = arith.constant 0 : i32
    return %c0_i32, %c0_i32_0 : i32, i32
  }
  func.func @transform_8(%arg0: i32) -> (i32, i32, i32) {
    %c0_i32 = arith.constant 0 : i32
    %c0_i32_0 = arith.constant 0 : i32
    %c0_i32_1 = arith.constant 0 : i32
    return %arg0, %c0_i32, %c0_i32_0 : i32, i32, i32
  }
}

</mosaic_0001>

<llo_original>
// kernel: tpu_custom_call.1
$region0: #{tpu_custom_call.1}
  #allocation0 [shape = 'u32[]', space=smem, size = 0x4, offset = 0x4, fixed_abs, tag = 'smem constant byte address 0x4 - core index']
  #allocation1 [shape = 'u32[144,128]{1,0:T(1,128)}', space=vmem, size = 0x12000, scoped, tag = 'internal scratch']
  #allocation2 [shape = 'bf16[8,128]{1,0:T(8,128)(2,1)}', space=vmem, size = 0x800, scoped, tag = 'scratch operand']
  %s0 = inlined_call_operand.hbm [shape: bf16[2,8,128], index: 0, kind: input, shape index: {}]
  %s1 = inlined_call_operand.hbm [shape: bf16[2,8,128], index: 1, kind: input, shape index: {}]
  %s2 = inlined_call_operand.hbm [shape: bf16[2,8,128], index: 2, kind: input, shape index: {}]
  %s3 = inlined_call_operand.hbm [shape: bf16[128,128], index: 3, kind: input, shape index: {}]
  %s4 = inlined_call_operand.hbm [shape: bf16[128,128], index: 4, kind: input, shape index: {}]
  %s5 = inlined_call_operand.hbm [shape: bf16[128,128], index: 5, kind: input, shape index: {}]
  %s6 = inlined_call_operand.hbm [shape: bf16[128,128], index: 6, kind: input, shape index: {}]
  %s7 = inlined_call_operand.vmem [shape: f32[1,128], index: 7, kind: input, shape index: {}]
  %s8 = inlined_call_operand.hbm [shape: bf16[2,8,128], index: 8, kind: output, shape index: {}]
  %s9 = sld [smem:[#allocation0]]
  $region93: #{tpu_custom_call.1} parent=0
    _
  %s11 = ssub.s32 1, %s9
  %s12 = scalar_select 0, %s11, %s9
  $region1: #{tpu_custom_call.1} parent=0
    #allocation3 [shape = 'u8[4096]{0}', space=vmem, size = 0x1000, scoped, tag = 'input window, operand 0']
    #allocation4 [shape = 's32[2]{0}', space=sflag, size = 0x8, scoped, tag = 'scoped memory for tpu_custom_call.1']
    #allocation5 [shape = 's32[2]{0}', space=sflag, size = 0x8, scoped, tag = 'scoped memory for tpu_custom_call.1']
    #allocation6 [shape = 'u8[4096]{0}', space=vmem, size = 0x1000, scoped, tag = 'input window, operand 1']
    #allocation7 [shape = 's32[2]{0}', space=sflag, size = 0x8, scoped, tag = 'scoped memory for tpu_custom_call.1']
    #allocation8 [shape = 'u8[4096]{0}', space=vmem, size = 0x1000, scoped, tag = 'input window, operand 2']
    #allocation9 [shape = 'u8[32768]{0}', space=vmem, size = 0x8000, scoped, tag = 'input window, operand 3, single buffered']
    #allocation10 [shape = 's32[1]{0}', space=sflag, size = 0x4, scoped, tag = 'scoped memory for tpu_custom_call.1']
    #allocation11 [shape = 'u8[32768]{0}', space=vmem, size = 0x8000, scoped, tag = 'input window, operand 4, single buffered']
    #allocation12 [shape = 'u8[32768]{0}', space=vmem, size = 0x8000, scoped, tag = 'input window, operand 5, single buffered']
    #allocation13 [shape = 's32[1]{0}', space=sflag, size = 0x4, scoped, tag = 'scoped memory for tpu_custom_call.1']
    #allocation14 [shape = 'u8[32768]{0}', space=vmem, size = 0x8000, scoped, tag = 'input window, operand 6, single buffered']
    #allocation15 [shape = 'u8[4096]{0}', space=vmem, size = 0x1000, scoped, tag = 'output window, operand 0']
    %13 = vsyncpa [#allocation4], 0
    %s14 = scalar_lea.sflag [#allocation4], 1
    %15 = vsyncpa %s14, 0
    %16 = vsyncpa [#allocation7], 0
    %s17 = scalar_lea.sflag [#allocation7], 1
    %18 = vsyncpa %s17, 0
    %19 = vsyncpa [#allocation10], 0
    %20 = vsyncpa [#allocation13], 0
    %21 = vsyncpa [#allocation5], 0
    %s22 = scalar_lea.sflag [#allocation5], 1
    %23 = vsyncpa %s22, 0
    loop: start=0, step=1, limit=4
    $region2: #{tpu_custom_call.1} parent=1 // loop_pre_header
      _
    $region3: #{tpu_custom_call.1} parent=1 // loop_header
      %s25 = sphi 0, %s29
      %p26 = scmp.ge.s32.totalorder %s25, 4
      %s35 = sphi 0, %s37
      %s38 = sphi 0, %s35
      %s39 = sphi 0, %s38
      %s55 = sphi 0, %s39
      %s61 = sphi 0, %s63
      %s64 = sphi 0, %s61
      %s65 = sphi 0, %s64
      %s81 = sphi 0, %s65
      %s87 = sphi 0, %s89
      %s90 = sphi 0, %s87
      %s91 = sphi 0, %s90
      %s107 = sphi 0, %s91
      %s111 = sphi 0, %s111
      %s113 = sphi 0, %s111
      %s114 = sphi 0, %s113
      %s128 = sphi 0, %s114
      %s132 = sphi 0, %s132
      %s134 = sphi 0, %s132
      %s135 = sphi 0, %s134
      %s149 = sphi 0, %s135
      %s153 = sphi 0, %s153
      %s155 = sphi 0, %s153
      %s156 = sphi 0, %s155
      %s170 = sphi 0, %s156
      %s174 = sphi 0, %s174
      %s176 = sphi 0, %s174
      %s177 = sphi 0, %s176
      %s191 = sphi 0, %s177
      %s195 = sphi 0, %s195
      %s197 = sphi 0, %s195
      %s198 = sphi 0, %s197
      %s212 = sphi 0, %s198
      %s218 = sphi 0, %s220
      %s221 = sphi 0, %s218
      %s222 = sphi 0, %s221
      %s238 = sphi 0, %s222
    $region4: #{tpu_custom_call.1} parent=1 // loop_header_branch
      %28 = sbr.rel (%p26) target = $region8
    $region5: #{tpu_custom_call.1} parent=1 // loop_body
      %s30 = ssub.s32 %s25, 1
      %s31 = ssub.s32 %s25, 2
      %s32 = sadd.s32 %s25, 1
      %s33 = ssub.s32 %s25, %s32
      %p34 = scmp.eq.s32.totalorder %s33, 0
      %s36 = sadd.s32 %s35, 1
      %s37 = scalar_select %p34, %s35, %s36
      %p40 = pneg %p34
      %p41 = scmp.eq.s32.totalorder %s25, 1
      %p42 = por %p40, %p41
      %p43 = scmp.ne.s32.totalorder %s35, %s38
      %p44 = scmp.eq.s32.totalorder %s25, 0
      %p45 = por %p43, %p44
      %p46 = scmp.ne.s32.totalorder %s35, %s38
      %p47 = scmp.eq.s32.totalorder %s30, 1
      %p48 = por %p46, %p47
      %p49 = scmp.ne.s32.totalorder %s38, %s39
      %p50 = scmp.eq.s32.totalorder %s30, 0
      %p51 = por %p49, %p50
      %p52 = scmp.ne.s32.totalorder %s38, %s39
      %p53 = scmp.eq.s32.totalorder %s31, 1
      %p54 = por %p52, %p53
      %p56 = scmp.ne.s32.totalorder %s39, %s55
      %p57 = scmp.eq.s32.totalorder %s31, 0
      %p58 = por %p56, %p57
      %s59 = ssub.s32 %s25, %s32
      %p60 = scmp.eq.s32.totalorder %s59, 0
      %s62 = sadd.s32 %s61, 1
      %s63 = scalar_select %p60, %s61, %s62
      %p66 = pneg %p60
      %p67 = scmp.eq.s32.totalorder %s25, 1
      %p68 = por %p66, %p67
      %p69 = scmp.ne.s32.totalorder %s61, %s64
      %p70 = scmp.eq.s32.totalorder %s25, 0
      %p71 = por %p69, %p70
      %p72 = scmp.ne.s32.totalorder %s61, %s64
      %p73 = scmp.eq.s32.totalorder %s30, 1
      %p74 = por %p72, %p73
      %p75 = scmp.ne.s32.totalorder %s64, %s65
      %p76 = scmp.eq.s32.totalorder %s30, 0
      %p77 = por %p75, %p76
      %p78 = scmp.ne.s32.totalorder %s64, %s65
      %p79 = scmp.eq.s32.totalorder %s31, 1
      %p80 = por %p78, %p79
      %p82 = scmp.ne.s32.totalorder %s65, %s81
      %p83 = scmp.eq.s32.totalorder %s31, 0
      %p84 = por %p82, %p83
      %s85 = ssub.s32 %s25, %s32
      %p86 = scmp.eq.s32.totalorder %s85, 0
      %s88 = sadd.s32 %s87, 1
      %s89 = scalar_select %p86, %s87, %s88
      %p92 = pneg %p86
      %p93 = scmp.eq.s32.totalorder %s25, 1
      %p94 = por %p92, %p93
      %p95 = scmp.ne.s32.totalorder %s87, %s90
      %p96 = scmp.eq.s32.totalorder %s25, 0
      %p97 = por %p95, %p96
      %p98 = scmp.ne.s32.totalorder %s87, %s90
      %p99 = scmp.eq.s32.totalorder %s30, 1
      %p100 = por %p98, %p99
      %p101 = scmp.ne.s32.totalorder %s90, %s91
      %p102 = scmp.eq.s32.totalorder %s30, 0
      %p103 = por %p101, %p102
      %p104 = scmp.ne.s32.totalorder %s90, %s91
      %p105 = scmp.eq.s32.totalorder %s31, 1
      %p106 = por %p104, %p105
      %p108 = scmp.ne.s32.totalorder %s91, %s107
      %p109 = scmp.eq.s32.totalorder %s31, 0
      %p110 = por %p108, %p109
      %s112 = sadd.s32 %s111, 1
      %p115 = scmp.eq.s32.totalorder %s25, 1
      %p116 = scmp.ne.s32.totalorder %s111, %s113
      %p117 = scmp.eq.s32.totalorder %s25, 0
      %p118 = por %p116, %p117
      %p119 = scmp.ne.s32.totalorder %s111, %s113
      %p120 = scmp.eq.s32.totalorder %s30, 1
      %p121 = por %p119, %p120
      %p122 = scmp.ne.s32.totalorder %s113, %s114
      %p123 = scmp.eq.s32.totalorder %s30, 0
      %p124 = por %p122, %p123
      %p125 = scmp.ne.s32.totalorder %s113, %s114
      %p126 = scmp.eq.s32.totalorder %s31, 1
      %p127 = por %p125, %p126
      %p129 = scmp.ne.s32.totalorder %s114, %s128
      %p130 = scmp.eq.s32.totalorder %s31, 0
      %p131 = por %p129, %p130
      %s133 = sadd.s32 %s132, 1
      %p136 = scmp.eq.s32.totalorder %s25, 1
      %p137 = scmp.ne.s32.totalorder %s132, %s134
      %p138 = scmp.eq.s32.totalorder %s25, 0
      %p139 = por %p137, %p138
      %p140 = scmp.ne.s32.totalorder %s132, %s134
      %p141 = scmp.eq.s32.totalorder %s30, 1
      %p142 = por %p140, %p141
      %p143 = scmp.ne.s32.totalorder %s134, %s135
      %p144 = scmp.eq.s32.totalorder %s30, 0
      %p145 = por %p143, %p144
      %p146 = scmp.ne.s32.totalorder %s134, %s135
      %p147 = scmp.eq.s32.totalorder %s31, 1
      %p148 = por %p146, %p147
      %p150 = scmp.ne.s32.totalorder %s135, %s149
      %p151 = scmp.eq.s32.totalorder %s31, 0
      %p152 = por %p150, %p151
      %s154 = sadd.s32 %s153, 1
      %p157 = scmp.eq.s32.totalorder %s25, 1
      %p158 = scmp.ne.s32.totalorder %s153, %s155
      %p159 = scmp.eq.s32.totalorder %s25, 0
      %p160 = por %p158, %p159
      %p161 = scmp.ne.s32.totalorder %s153, %s155
      %p162 = scmp.eq.s32.totalorder %s30, 1
      %p163 = por %p161, %p162
      %p164 = scmp.ne.s32.totalorder %s155, %s156
      %p165 = scmp.eq.s32.totalorder %s30, 0
      %p166 = por %p164, %p165
      %p167 = scmp.ne.s32.totalorder %s155, %s156
      %p168 = scmp.eq.s32.totalorder %s31, 1
      %p169 = por %p167, %p168
      %p171 = scmp.ne.s32.totalorder %s156, %s170
      %p172 = scmp.eq.s32.totalorder %s31, 0
      %p173 = por %p171, %p172
      %s175 = sadd.s32 %s174, 1
      %p178 = scmp.eq.s32.totalorder %s25, 1
      %p179 = scmp.ne.s32.totalorder %s174, %s176
      %p180 = scmp.eq.s32.totalorder %s25, 0
      %p181 = por %p179, %p180
      %p182 = scmp.ne.s32.totalorder %s174, %s176
      %p183 = scmp.eq.s32.totalorder %s30, 1
      %p184 = por %p182, %p183
      %p185 = scmp.ne.s32.totalorder %s176, %s177
      %p186 = scmp.eq.s32.totalorder %s30, 0
      %p187 = por %p185, %p186
      %p188 = scmp.ne.s32.totalorder %s176, %s177
      %p189 = scmp.eq.s32.totalorder %s31, 1
      %p190 = por %p188, %p189
      %p192 = scmp.ne.s32.totalorder %s177, %s191
      %p193 = scmp.eq.s32.totalorder %s31, 0
      %p194 = por %p192, %p193
      %s196 = sadd.s32 %s195, 1
      %p199 = scmp.eq.s32.totalorder %s25, 1
      %p200 = scmp.ne.s32.totalorder %s195, %s197
      %p201 = scmp.eq.s32.totalorder %s25, 0
      %p202 = por %p200, %p201
      %p203 = scmp.ne.s32.totalorder %s195, %s197
      %p204 = scmp.eq.s32.totalorder %s30, 1
      %p205 = por %p203, %p204
      %p206 = scmp.ne.s32.totalorder %s197, %s198
      %p207 = scmp.eq.s32.totalorder %s30, 0
      %p208 = por %p206, %p207
      %p209 = scmp.ne.s32.totalorder %s197, %s198
      %p210 = scmp.eq.s32.totalorder %s31, 1
      %p211 = por %p209, %p210
      %p213 = scmp.ne.s32.totalorder %s198, %s212
      %p214 = scmp.eq.s32.totalorder %s31, 0
      %p215 = por %p213, %p214
      %s216 = ssub.s32 %s25, %s32
      %p217 = scmp.eq.s32.totalorder %s216, 0
      %s219 = sadd.s32 %s218, 1
      %s220 = scalar_select %p217, %s218, %s219
      %p223 = pneg %p217
      %p224 = scmp.eq.s32.totalorder %s25, 1
      %p225 = por %p223, %p224
      %p226 = scmp.ne.s32.totalorder %s218, %s221
      %p227 = scmp.eq.s32.totalorder %s25, 0
      %p228 = por %p226, %p227
      %p229 = scmp.ne.s32.totalorder %s218, %s221
      %p230 = scmp.eq.s32.totalorder %s30, 1
      %p231 = por %p229, %p230
      %p232 = scmp.ne.s32.totalorder %s221, %s222
      %p233 = scmp.eq.s32.totalorder %s30, 0
      %p234 = por %p232, %p233
      %p235 = scmp.ne.s32.totalorder %s221, %s222
      %p236 = scmp.eq.s32.totalorder %s31, 1
      %p237 = por %p235, %p236
      %p239 = scmp.ne.s32.totalorder %s222, %s238
      %p240 = scmp.eq.s32.totalorder %s31, 0
      %p241 = por %p239, %p240
      %p242 = scmp.le.s32.totalorder 1, %s25
      %p243 = scmp.lt.s32.totalorder %s25, 3
      %p244 = pnand %p242, %p243
      %p245 = pneg %p244
      // Predicated region
      $region9: #{tpu_custom_call.1} parent=5 // pred_check
        _
      $region10: #{tpu_custom_call.1} parent=5 // pred_check_branch
        %247 = sbr.rel (%p244) target = $region12
      $region11: #{tpu_custom_call.1} parent=5 // pred_region
        %s248 = ssub.s32 %s25, 1
        // Predicated region
        $region13: #{tpu_custom_call.1} parent=11 // pred_check
          %p249 = pneg %p124
        $region14: #{tpu_custom_call.1} parent=11 // pred_check_branch
          %251 = sbr.rel (%p249) target = $region16
        $region15: #{tpu_custom_call.1} parent=11 // pred_region
          %s253 = ssub.s32 1024, 1024
          %254 = vsyncadd [#allocation10], %s253
          %s255 = sshll.u32 [#allocation9], 4
          %s256 = int_to_ptr.vmem [resolvable:$true] %s255
          %261 = dma.hbm_to_vmem [thread:$0]  %s3, 1024, %s256, [#allocation10], 64, 64, 4
        $region16: #{tpu_custom_call.1} parent=11 // pred_fallthru
          _
        // Predicated region
        $region17: #{tpu_custom_call.1} parent=11 // pred_check
          %p262 = pneg %p145
        $region18: #{tpu_custom_call.1} parent=11 // pred_check_branch
          %264 = sbr.rel (%p262) target = $region20
        $region19: #{tpu_custom_call.1} parent=11 // pred_region
          %s266 = ssub.s32 1024, 1024
          %267 = vsyncadd [#allocation10], %s266
          %s268 = sshll.u32 [#allocation11], 4
          %s269 = int_to_ptr.vmem [resolvable:$true] %s268
          %274 = dma.hbm_to_vmem [thread:$0]  %s4, 1024, %s269, [#allocation10], 64, 64, 4
        $region20: #{tpu_custom_call.1} parent=11 // pred_fallthru
          _
        // Predicated region
        $region21: #{tpu_custom_call.1} parent=11 // pred_check
          %p275 = pneg %p166
        $region22: #{tpu_custom_call.1} parent=11 // pred_check_branch
          %277 = sbr.rel (%p275) target = $region24
        $region23: #{tpu_custom_call.1} parent=11 // pred_region
          %s279 = ssub.s32 1024, 1024
          %280 = vsyncadd [#allocation13], %s279
          %s281 = sshll.u32 [#allocation12], 4
          %s282 = int_to_ptr.vmem [resolvable:$true] %s281
          %287 = dma.hbm_to_vmem [thread:$0]  %s5, 1024, %s282, [#allocation13], 64, 64, 4
        $region24: #{tpu_custom_call.1} parent=11 // pred_fallthru
          _
        // Predicated region
        $region25: #{tpu_custom_call.1} parent=11 // pred_check
          %p288 = pneg %p187
        $region26: #{tpu_custom_call.1} parent=11 // pred_check_branch
          %290 = sbr.rel (%p288) target = $region28
        $region27: #{tpu_custom_call.1} parent=11 // pred_region
          %s292 = ssub.s32 1024, 1024
          %293 = vsyncadd [#allocation13], %s292
          %s294 = sshll.u32 [#allocation14], 4
          %s295 = int_to_ptr.vmem [resolvable:$true] %s294
          %300 = dma.hbm_to_vmem [thread:$0]  %s6, 1024, %s295, [#allocation13], 64, 64, 4
        $region28: #{tpu_custom_call.1} parent=11 // pred_fallthru
          _
        // Predicated region
        $region29: #{tpu_custom_call.1} parent=11 // pred_check
          %p301 = pneg %p208
        $region30: #{tpu_custom_call.1} parent=11 // pred_check_branch
          %303 = sbr.rel (%p301) target = $region32
        $region31: #{tpu_custom_call.1} parent=11 // pred_region
          _
        $region32: #{tpu_custom_call.1} parent=11 // pred_fallthru
          _
      $region12: #{tpu_custom_call.1} parent=5 // pred_fallthru
        _
      %p304 = scmp.lt.s32.totalorder %s25, 2
      // Predicated region
      $region33: #{tpu_custom_call.1} parent=5 // pred_check
        %p305 = pneg %p304
      $region34: #{tpu_custom_call.1} parent=5 // pred_check_branch
        %307 = sbr.rel (%p305) target = $region36
      $region35: #{tpu_custom_call.1} parent=5 // pred_region
        // Predicated region
        $region37: #{tpu_custom_call.1} parent=35 // pred_check
          %p308 = pneg %p45
        $region38: #{tpu_custom_call.1} parent=35 // pred_check_branch
          %310 = sbr.rel (%p308) target = $region40
        $region39: #{tpu_custom_call.1} parent=35 // pred_region
          %s311 = sand.u32 %s35, 1
          %s312 = scalar_lea.sflag [#allocation4], %s311
          %s313 = sand.u32 %s35, 1
          %s314 = smul.addr %s313, 4
          %s315 = scalar_lea.vmem [#allocation3], %s314
          %s317 = ssub.s32 64, 64
          %318 = vsyncadd %s312, %s317
          %s319 = smul.addr %s25, 64
          %s320 = scalar_lea.hbm %s0, %s319
          %s322 = sshll.u32 %s315, 4
          %s323 = int_to_ptr.vmem [resolvable:$true] %s322
          %325 = dma.hbm_to_vmem [thread:$0]  %s320, 64, %s323, %s312
        $region40: #{tpu_custom_call.1} parent=35 // pred_fallthru
          _
        // Predicated region
        $region41: #{tpu_custom_call.1} parent=35 // pred_check
          %p326 = pneg %p71
        $region42: #{tpu_custom_call.1} parent=35 // pred_check_branch
          %328 = sbr.rel (%p326) target = $region44
        $region43: #{tpu_custom_call.1} parent=35 // pred_region
          %s329 = sand.u32 %s25, 1
          %s330 = scalar_lea.sflag [#allocation7], %s329
          %s331 = sand.u32 %s61, 1
          %s332 = smul.addr %s331, 4
          %s333 = scalar_lea.vmem [#allocation6], %s332
          %s335 = ssub.s32 64, 64
          %336 = vsyncadd %s330, %s335
          %s337 = smul.addr %s25, 64
          %s338 = scalar_lea.hbm %s1, %s337
          %s340 = sshll.u32 %s333, 4
          %s341 = int_to_ptr.vmem [resolvable:$true] %s340
          %343 = dma.hbm_to_vmem [thread:$0]  %s338, 64, %s341, %s330
        $region44: #{tpu_custom_call.1} parent=35 // pred_fallthru
          _
        // Predicated region
        $region45: #{tpu_custom_call.1} parent=35 // pred_check
          %p344 = pneg %p97
        $region46: #{tpu_custom_call.1} parent=35 // pred_check_branch
          %346 = sbr.rel (%p344) target = $region48
        $region47: #{tpu_custom_call.1} parent=35 // pred_region
          %s347 = sand.u32 %s25, 1
          %s348 = scalar_lea.sflag [#allocation7], %s347
          %s349 = sand.u32 %s87, 1
          %s350 = smul.addr %s349, 4
          %s351 = scalar_lea.vmem [#allocation8], %s350
          %s353 = ssub.s32 64, 64
          %354 = vsyncadd %s348, %s353
          %s355 = smul.addr %s25, 64
          %s356 = scalar_lea.hbm %s2, %s355
          %s358 = sshll.u32 %s351, 4
          %s359 = int_to_ptr.vmem [resolvable:$true] %s358
          %361 = dma.hbm_to_vmem [thread:$0]  %s356, 64, %s359, %s348
        $region48: #{tpu_custom_call.1} parent=35 // pred_fallthru
          _
      $region36: #{tpu_custom_call.1} parent=5 // pred_fallthru
        _
      %p362 = scmp.le.s32.totalorder 1, %s25
      %p363 = scmp.lt.s32.totalorder %s25, 3
      %p364 = pnand %p362, %p363
      %p365 = pneg %p364
      // Predicated region
      $region49: #{tpu_custom_call.1} parent=5 // pred_check
        _
      $region50: #{tpu_custom_call.1} parent=5 // pred_check_branch
        %367 = sbr.rel (%p364) target = $region52
      $region51: #{tpu_custom_call.1} parent=5 // pred_region
        %s368 = ssub.s32 %s25, 1
        %s369 = sand.u32 %s38, 1
        %s370 = scalar_lea.sflag [#allocation4], %s369
        %s371 = sand.u32 %s38, 1
        %s372 = smul.addr %s371, 4
        %s373 = scalar_lea.vmem [#allocation3], %s372
        // Predicated region
        $region53: #{tpu_custom_call.1} parent=51 // pred_check
          %p374 = pneg %p51
        $region54: #{tpu_custom_call.1} parent=51 // pred_check_branch
          %376 = sbr.rel (%p374) target = $region56
        $region55: #{tpu_custom_call.1} parent=51 // pred_region
          %377 = dma.done %s370, 64
        $region56: #{tpu_custom_call.1} parent=51 // pred_fallthru
          _
        %s378 = sand.u32 %s30, 1
        %s379 = scalar_lea.sflag [#allocation7], %s378
        %s380 = sand.u32 %s64, 1
        %s381 = smul.addr %s380, 4
        %s382 = scalar_lea.vmem [#allocation6], %s381
        // Predicated region
        $region57: #{tpu_custom_call.1} parent=51 // pred_check
          %p383 = pneg %p77
        $region58: #{tpu_custom_call.1} parent=51 // pred_check_branch
          %385 = sbr.rel (%p383) target = $region60
        $region59: #{tpu_custom_call.1} parent=51 // pred_region
          %386 = dma.done %s379, 64
        $region60: #{tpu_custom_call.1} parent=51 // pred_fallthru
          _
        %s387 = sand.u32 %s30, 1
        %s388 = scalar_lea.sflag [#allocation7], %s387
        %s389 = sand.u32 %s90, 1
        %s390 = smul.addr %s389, 4
        %s391 = scalar_lea.vmem [#allocation8], %s390
        // Predicated region
        $region61: #{tpu_custom_call.1} parent=51 // pred_check
          %p392 = pneg %p103
        $region62: #{tpu_custom_call.1} parent=51 // pred_check_branch
          %394 = sbr.rel (%p392) target = $region64
        $region63: #{tpu_custom_call.1} parent=51 // pred_region
          %395 = dma.done %s388, 64
        $region64: #{tpu_custom_call.1} parent=51 // pred_fallthru
          _
        // Predicated region
        $region65: #{tpu_custom_call.1} parent=51 // pred_check
          %p396 = pneg %p124
        $region66: #{tpu_custom_call.1} parent=51 // pred_check_branch
          %398 = sbr.rel (%p396) target = $region68
        $region67: #{tpu_custom_call.1} parent=51 // pred_region
          %399 = dma.done [#allocation10], 1024
        $region68: #{tpu_custom_call.1} parent=51 // pred_fallthru
          _
        // Predicated region
        $region69: #{tpu_custom_call.1} parent=51 // pred_check
          %p400 = pneg %p145
        $region70: #{tpu_custom_call.1} parent=51 // pred_check_branch
          %402 = sbr.rel (%p400) target = $region72
        $region71: #{tpu_custom_call.1} parent=51 // pred_region
          %403 = dma.done [#allocation10], 1024
        $region72: #{tpu_custom_call.1} parent=51 // pred_fallthru
          _
        // Predicated region
        $region73: #{tpu_custom_call.1} parent=51 // pred_check
          %p404 = pneg %p166
        $region74: #{tpu_custom_call.1} parent=51 // pred_check_branch
          %406 = sbr.rel (%p404) target = $region76
        $region75: #{tpu_custom_call.1} parent=51 // pred_region
          %407 = dma.done [#allocation13], 1024
        $region76: #{tpu_custom_call.1} parent=51 // pred_fallthru
          _
        // Predicated region
        $region77: #{tpu_custom_call.1} parent=51 // pred_check
          %p408 = pneg %p187
        $region78: #{tpu_custom_call.1} parent=51 // pred_check_branch
          %410 = sbr.rel (%p408) target = $region80
        $region79: #{tpu_custom_call.1} parent=51 // pred_region
          %411 = dma.done [#allocation13], 1024
        $region80: #{tpu_custom_call.1} parent=51 // pred_fallthru
          _
        %s412 = sand.u32 %s38, 1
        %s413 = scalar_lea.sflag [#allocation4], %s412
        %s414 = sand.u32 %s38, 1
        %s415 = smul.addr %s414, 4
        %s416 = scalar_lea.vmem [#allocation3], %s415
        %p417 = pneg %p51
        %p418 = pneg %p48
        %s419 = sand.u32 %s30, 1
        %s420 = scalar_lea.sflag [#allocation7], %s419
        %s421 = sand.u32 %s64, 1
        %s422 = smul.addr %s421, 4
        %s423 = scalar_lea.vmem [#allocation6], %s422
        %p424 = pneg %p77
        %p425 = pneg %p74
        %s426 = sand.u32 %s30, 1
        %s427 = scalar_lea.sflag [#allocation7], %s426
        %s428 = sand.u32 %s90, 1
        %s429 = smul.addr %s428, 4
        %s430 = scalar_lea.vmem [#allocation8], %s429
        %p431 = pneg %p103
        %p432 = pneg %p100
        %p433 = pneg %p124
        %p434 = pneg %p121
        %p435 = pneg %p145
        %p436 = pneg %p142
        %p437 = pneg %p166
        %p438 = pneg %p163
        %p439 = pneg %p187
        %p440 = pneg %p184
        %p441 = pneg %p208
        %p442 = pneg %p205
        %p443 = pneg %p234
        %p444 = pneg %p231
        %s445 = sand.u32 %s221, 1
        %s446 = scalar_lea.sflag [#allocation5], %s445
        %s447 = sand.u32 %s221, 1
        %s448 = smul.addr %s447, 4
        %s449 = scalar_lea.vmem [#allocation15], %s448
        %v451 = vld [vmem:[%s373] sm:$0xf]
        %v452 = vld [vmem:[%s382] sm:$0xf]
        %v453 = vld [vmem:[%s391] sm:$0xf]
        %v454 = vld [vmem:[#allocation9] sm:$0xf]
        %v455 = vld [vmem:[#allocation9 + $0x4] sm:$0xf]
        %v456 = vld [vmem:[#allocation9 + $0x8] sm:$0xf]
        %v457 = vld [vmem:[#allocation9 + $0xc] sm:$0xf]
        %v458 = vld [vmem:[#allocation9 + $0x10] sm:$0xf]
        %v459 = vld [vmem:[#allocation9 + $0x14] sm:$0xf]
        %v460 = vld [vmem:[#allocation9 + $0x18] sm:$0xf]
        %v461 = vld [vmem:[#allocation9 + $0x1c] sm:$0xf]
        %v462 = vld [vmem:[#allocation9 + $0x20] sm:$0xf]
        %v463 = vld [vmem:[#allocation9 + $0x24] sm:$0xf]
        %v464 = vld [vmem:[#allocation9 + $0x28] sm:$0xf]
        %v465 = vld [vmem:[#allocation9 + $0x2c] sm:$0xf]
        %v466 = vld [vmem:[#allocation9 + $0x30] sm:$0xf]
        %v467 = vld [vmem:[#allocation9 + $0x34] sm:$0xf]
        %v468 = vld [vmem:[#allocation9 + $0x38] sm:$0xf]
        %v469 = vld [vmem:[#allocation9 + $0x3c] sm:$0xf]
        %v486 = vunpack.c.l.b16 %v454
        %v487 = vunpack.c.l.b16 %v455
        %v488 = vunpack.c.l.b16 %v456
        %v489 = vunpack.c.l.b16 %v457
        %v490 = vunpack.c.l.b16 %v458
        %v491 = vunpack.c.l.b16 %v459
        %v492 = vunpack.c.l.b16 %v460
        %v493 = vunpack.c.l.b16 %v461
        %v494 = vunpack.c.l.b16 %v462
        %v495 = vunpack.c.l.b16 %v463
        %v496 = vunpack.c.l.b16 %v464
        %v497 = vunpack.c.l.b16 %v465
        %v498 = vunpack.c.l.b16 %v466
        %v499 = vunpack.c.l.b16 %v467
        %v500 = vunpack.c.l.b16 %v468
        %v501 = vunpack.c.l.b16 %v469
        %v502 = vpack.c.b16 %v487, %v486
        %v503 = vpack.c.b16 %v489, %v488
        %v504 = vpack.c.b16 %v491, %v490
        %v505 = vpack.c.b16 %v493, %v492
        %v506 = vpack.c.b16 %v495, %v494
        %v507 = vpack.c.b16 %v497, %v496
        %v508 = vpack.c.b16 %v499, %v498
        %v509 = vpack.c.b16 %v501, %v500
        %518 = vmatprep.subr.bf16.mxu0 0
        %519 = vmatpush1.bf16.msra.mxu0 %v502
        %520 = vmatprep.subr.bf16.mxu0 0
        %521 = vmatpush1.bf16.msra.mxu0 %v503
        %522 = vmatprep.subr.bf16.mxu0 0
        %523 = vmatpush1.bf16.msra.mxu0 %v504
        %524 = vmatprep.subr.bf16.mxu0 0
        %525 = vmatpush1.bf16.msra.mxu0 %v505
        %526 = vmatprep.subr.bf16.mxu0 0
        %527 = vmatpush1.bf16.msra.mxu0 %v506
        %528 = vmatprep.subr.bf16.mxu0 0
        %529 = vmatpush1.bf16.msra.mxu0 %v507
        %530 = vmatprep.subr.bf16.mxu0 0
        %531 = vmatpush1.bf16.msra.mxu0 %v508
        %532 = vmatprep.subr.bf16.mxu0 0
        %533 = vmatpush1.bf16.msra.mxu0 %v509
        %534 = vmatprep.subr.bf16.mxu0 0
        %535 = vmatpush1.bf16.msra.mxu0 0
        %536 = vmatprep.subr.bf16.mxu0 0
        %537 = vmatpush1.bf16.msra.mxu0 0
        %538 = vmatprep.subr.bf16.mxu0 0
        %539 = vmatpush1.bf16.msra.mxu0 0
        %540 = vmatprep.subr.bf16.mxu0 0
        %541 = vmatpush1.bf16.msra.mxu0 0
        %542 = vmatprep.subr.bf16.mxu0 0
        %543 = vmatpush1.bf16.msra.mxu0 0
        %544 = vmatprep.subr.bf16.mxu0 0
        %545 = vmatpush1.bf16.msra.mxu0 0
        %546 = vmatprep.subr.bf16.mxu0 0
        %547 = vmatpush1.bf16.msra.mxu0 0
        %548 = vmatprep.subr.bf16.mxu0 0
        %549 = vmatpush1.bf16.msra.mxu0 0
        %550 = vmatprep.mubr.bf16.mxu0 0
        %551 = vmatmul.mubr.bf16.gmra.mrb[0].mxu0 %v451
        %v552 = vpop.f32.mrb[0].mxu0
        %v553 = vadd.f32 0.0, %v552
        %v554 = vpop.f32.mrb[0].mxu0
        %v555 = vpop.f32.mrb[0].mxu0
        %v556 = vpop.f32.mrb[0].mxu0
        %557 = vdwg.mxu0
        %v558 = vmul.f32 %v553, 0.35355338
        %v559 = vpack.c.bf16 %v558, %v558
        %v560 = vld [vmem:[#allocation11] sm:$0xf]
        %v561 = vld [vmem:[#allocation11 + $0x4] sm:$0xf]
        %v562 = vld [vmem:[#allocation11 + $0x8] sm:$0xf]
        %v563 = vld [vmem:[#allocation11 + $0xc] sm:$0xf]
        %v564 = vld [vmem:[#allocation11 + $0x10] sm:$0xf]
        %v565 = vld [vmem:[#allocation11 + $0x14] sm:$0xf]
        %v566 = vld [vmem:[#allocation11 + $0x18] sm:$0xf]
        %v567 = vld [vmem:[#allocation11 + $0x1c] sm:$0xf]
        %v568 = vld [vmem:[#allocation11 + $0x20] sm:$0xf]
        %v569 = vld [vmem:[#allocation11 + $0x24] sm:$0xf]
        %v570 = vld [vmem:[#allocation11 + $0x28] sm:$0xf]
        %v571 = vld [vmem:[#allocation11 + $0x2c] sm:$0xf]
        %v572 = vld [vmem:[#allocation11 + $0x30] sm:$0xf]
        %v573 = vld [vmem:[#allocation11 + $0x34] sm:$0xf]
        %v574 = vld [vmem:[#allocation11 + $0x38] sm:$0xf]
        %v575 = vld [vmem:[#allocation11 + $0x3c] sm:$0xf]
        %v592 = vunpack.c.l.b16 %v560
        %v593 = vunpack.c.l.b16 %v561
        %v594 = vunpack.c.l.b16 %v562
        %v595 = vunpack.c.l.b16 %v563
        %v596 = vunpack.c.l.b16 %v564
        %v597 = vunpack.c.l.b16 %v565
        %v598 = vunpack.c.l.b16 %v566
        %v599 = vunpack.c.l.b16 %v567
        %v600 = vunpack.c.l.b16 %v568
        %v601 = vunpack.c.l.b16 %v569
        %v602 = vunpack.c.l.b16 %v570
        %v603 = vunpack.c.l.b16 %v571
        %v604 = vunpack.c.l.b16 %v572
        %v605 = vunpack.c.l.b16 %v573
        %v606 = vunpack.c.l.b16 %v574
        %v607 = vunpack.c.l.b16 %v575
        %v608 = vpack.c.b16 %v593, %v592
        %v609 = vpack.c.b16 %v595, %v594
        %v610 = vpack.c.b16 %v597, %v596
        %v611 = vpack.c.b16 %v599, %v598
        %v612 = vpack.c.b16 %v601, %v600
        %v613 = vpack.c.b16 %v603, %v602
        %v614 = vpack.c.b16 %v605, %v604
        %v615 = vpack.c.b16 %v607, %v606
        %624 = vmatprep.subr.bf16.mxu0 0
        %625 = vmatpush1.bf16.msra.mxu0 %v608
        %626 = vmatprep.subr.bf16.mxu0 0
        %627 = vmatpush1.bf16.msra.mxu0 %v609
        %628 = vmatprep.subr.bf16.mxu0 0
        %629 = vmatpush1.bf16.msra.mxu0 %v610
        %630 = vmatprep.subr.bf16.mxu0 0
        %631 = vmatpush1.bf16.msra.mxu0 %v611
        %632 = vmatprep.subr.bf16.mxu0 0
        %633 = vmatpush1.bf16.msra.mxu0 %v612
        %634 = vmatprep.subr.bf16.mxu0 0
        %635 = vmatpush1.bf16.msra.mxu0 %v613
        %636 = vmatprep.subr.bf16.mxu0 0
        %637 = vmatpush1.bf16.msra.mxu0 %v614
        %638 = vmatprep.subr.bf16.mxu0 0
        %639 = vmatpush1.bf16.msra.mxu0 %v615
        %640 = vmatprep.subr.bf16.mxu0 0
        %641 = vmatpush1.bf16.msra.mxu0 0
        %642 = vmatprep.subr.bf16.mxu0 0
        %643 = vmatpush1.bf16.msra.mxu0 0
        %644 = vmatprep.subr.bf16.mxu0 0
        %645 = vmatpush1.bf16.msra.mxu0 0
        %646 = vmatprep.subr.bf16.mxu0 0
        %647 = vmatpush1.bf16.msra.mxu0 0
        %648 = vmatprep.subr.bf16.mxu0 0
        %649 = vmatpush1.bf16.msra.mxu0 0
        %650 = vmatprep.subr.bf16.mxu0 0
        %651 = vmatpush1.bf16.msra.mxu0 0
        %652 = vmatprep.subr.bf16.mxu0 0
        %653 = vmatpush1.bf16.msra.mxu0 0
        %654 = vmatprep.subr.bf16.mxu0 0
        %655 = vmatpush1.bf16.msra.mxu0 0
        %656 = vmatprep.mubr.bf16.mxu0 0
        %657 = vmatmul.mubr.bf16.gmra.mrb[0].mxu0 %v452
        %v658 = vpop.f32.mrb[0].mxu0
        %v659 = vadd.f32 0.0, %v658
        %v660 = vpop.f32.mrb[0].mxu0
        %v661 = vpop.f32.mrb[0].mxu0
        %v662 = vpop.f32.mrb[0].mxu0
        %663 = vdwg.mxu0
        %v664 = vpack.c.bf16 %v659, %v659
        %v665 = vld [vmem:[#allocation12] sm:$0xf]
        %v666 = vld [vmem:[#allocation12 + $0x4] sm:$0xf]
        %v667 = vld [vmem:[#allocation12 + $0x8] sm:$0xf]
        %v668 = vld [vmem:[#allocation12 + $0xc] sm:$0xf]
        %v669 = vld [vmem:[#allocation12 + $0x10] sm:$0xf]
        %v670 = vld [vmem:[#allocation12 + $0x14] sm:$0xf]
        %v671 = vld [vmem:[#allocation12 + $0x18] sm:$0xf]
        %v672 = vld [vmem:[#allocation12 + $0x1c] sm:$0xf]
        %v673 = vld [vmem:[#allocation12 + $0x20] sm:$0xf]
        %v674 = vld [vmem:[#allocation12 + $0x24] sm:$0xf]
        %v675 = vld [vmem:[#allocation12 + $0x28] sm:$0xf]
        %v676 = vld [vmem:[#allocation12 + $0x2c] sm:$0xf]
        %v677 = vld [vmem:[#allocation12 + $0x30] sm:$0xf]
        %v678 = vld [vmem:[#allocation12 + $0x34] sm:$0xf]
        %v679 = vld [vmem:[#allocation12 + $0x38] sm:$0xf]
        %v680 = vld [vmem:[#allocation12 + $0x3c] sm:$0xf]
        %v697 = vunpack.c.l.b16 %v665
        %v698 = vunpack.c.l.b16 %v666
        %v699 = vunpack.c.l.b16 %v667
        %v700 = vunpack.c.l.b16 %v668
        %v701 = vunpack.c.l.b16 %v669
        %v702 = vunpack.c.l.b16 %v670
        %v703 = vunpack.c.l.b16 %v671
        %v704 = vunpack.c.l.b16 %v672
        %v705 = vunpack.c.l.b16 %v673
        %v706 = vunpack.c.l.b16 %v674
        %v707 = vunpack.c.l.b16 %v675
        %v708 = vunpack.c.l.b16 %v676
        %v709 = vunpack.c.l.b16 %v677
        %v710 = vunpack.c.l.b16 %v678
        %v711 = vunpack.c.l.b16 %v679
        %v712 = vunpack.c.l.b16 %v680
        %v713 = vpack.c.b16 %v698, %v697
        %v714 = vpack.c.b16 %v700, %v699
        %v715 = vpack.c.b16 %v702, %v701
        %v716 = vpack.c.b16 %v704, %v703
        %v717 = vpack.c.b16 %v706, %v705
        %v718 = vpack.c.b16 %v708, %v707
        %v719 = vpack.c.b16 %v710, %v709
        %v720 = vpack.c.b16 %v712, %v711
        %729 = vmatprep.subr.bf16.mxu0 0
        %730 = vmatpush1.bf16.msra.mxu0 %v713
        %731 = vmatprep.subr.bf16.mxu0 0
        %732 = vmatpush1.bf16.msra.mxu0 %v714
        %733 = vmatprep.subr.bf16.mxu0 0
        %734 = vmatpush1.bf16.msra.mxu0 %v715
        %735 = vmatprep.subr.bf16.mxu0 0
        %736 = vmatpush1.bf16.msra.mxu0 %v716
        %737 = vmatprep.subr.bf16.mxu0 0
        %738 = vmatpush1.bf16.msra.mxu0 %v717
        %739 = vmatprep.subr.bf16.mxu0 0
        %740 = vmatpush1.bf16.msra.mxu0 %v718
        %741 = vmatprep.subr.bf16.mxu0 0
        %742 = vmatpush1.bf16.msra.mxu0 %v719
        %743 = vmatprep.subr.bf16.mxu0 0
        %744 = vmatpush1.bf16.msra.mxu0 %v720
        %745 = vmatprep.subr.bf16.mxu0 0
        %746 = vmatpush1.bf16.msra.mxu0 0
        %747 = vmatprep.subr.bf16.mxu0 0
        %748 = vmatpush1.bf16.msra.mxu0 0
        %749 = vmatprep.subr.bf16.mxu0 0
        %750 = vmatpush1.bf16.msra.mxu0 0
        %751 = vmatprep.subr.bf16.mxu0 0
        %752 = vmatpush1.bf16.msra.mxu0 0
        %753 = vmatprep.subr.bf16.mxu0 0
        %754 = vmatpush1.bf16.msra.mxu0 0
        %755 = vmatprep.subr.bf16.mxu0 0
        %756 = vmatpush1.bf16.msra.mxu0 0
        %757 = vmatprep.subr.bf16.mxu0 0
        %758 = vmatpush1.bf16.msra.mxu0 0
        %759 = vmatprep.subr.bf16.mxu0 0
        %760 = vmatpush1.bf16.msra.mxu0 0
        %761 = vmatprep.mubr.bf16.mxu0 0
        %762 = vmatmul.mubr.bf16.gmra.mrb[0].mxu0 %v453
        %v763 = vpop.f32.mrb[0].mxu0
        %v764 = vadd.f32 0.0, %v763
        %v765 = vpop.f32.mrb[0].mxu0
        %v766 = vpop.f32.mrb[0].mxu0
        %v767 = vpop.f32.mrb[0].mxu0
        %768 = vdwg.mxu0
        %v769 = vpack.c.bf16 %v764, %v764
        %vm770 = vcmask 1043712
        %771 = vst.msk [vmem:[#allocation2] sm:$0xf] %vm770, 0
        %vm772 = vcmask 64512
        %v774 = vsel %vm772, %v559, 0
        %v777 = vsel %vm772, %v664, 0
        %779 = vmatprep.subr.bf16.mxu0 0
        %780 = vmatpush1.bf16.xpose.msra.mxu0 %v777
        %781 = vmatprep.subr.bf16.mxu0 0
        %782 = vmatpush1.bf16.xpose.msra.mxu0 0
        %783 = vmatprep.subr.bf16.mxu0 0
        %784 = vmatpush1.bf16.xpose.msra.mxu0 0
        %785 = vmatprep.subr.bf16.mxu0 0
        %786 = vmatpush1.bf16.xpose.msra.mxu0 0
        %787 = vmatprep.subr.bf16.mxu0 0
        %788 = vmatpush1.bf16.xpose.msra.mxu0 0
        %789 = vmatprep.subr.bf16.mxu0 0
        %790 = vmatpush1.bf16.xpose.msra.mxu0 0
        %791 = vmatprep.subr.bf16.mxu0 0
        %792 = vmatpush1.bf16.xpose.msra.mxu0 0
        %793 = vmatprep.subr.bf16.mxu0 0
        %794 = vmatpush1.bf16.xpose.msra.mxu0 0
        %795 = vmatprep.subr.bf16.mxu0 0
        %796 = vmatpush1.bf16.xpose.msra.mxu0 0
        %797 = vmatprep.subr.bf16.mxu0 0
        %798 = vmatpush1.bf16.xpose.msra.mxu0 0
        %799 = vmatprep.subr.bf16.mxu0 0
        %800 = vmatpush1.bf16.xpose.msra.mxu0 0
        %801 = vmatprep.subr.bf16.mxu0 0
        %802 = vmatpush1.bf16.xpose.msra.mxu0 0
        %803 = vmatprep.subr.bf16.mxu0 0
        %804 = vmatpush1.bf16.xpose.msra.mxu0 0
        %805 = vmatprep.subr.bf16.mxu0 0
        %806 = vmatpush1.bf16.xpose.msra.mxu0 0
        %807 = vmatprep.subr.bf16.mxu0 0
        %808 = vmatpush1.bf16.xpose.msra.mxu0 0
        %809 = vmatprep.subr.bf16.mxu0 0
        %810 = vmatpush1.bf16.xpose.msra.mxu0 0
        %811 = vmatprep.mubr.bf16.mxu0 0
        %812 = vmatmul.mubr.bf16.gmra.mrb[0].mxu0 %v774
        %v813 = vpop.f32.mrb[0].mxu0
        %v814 = vadd.f32 0.0, %v813
        %v815 = vpop.f32.mrb[0].mxu0
        %v816 = vpop.f32.mrb[0].mxu0
        %v817 = vpop.f32.mrb[0].mxu0
        %818 = vdwg.mxu0
        %v819 = vsel %vm772, %v814, -inf
        %820 = vmax.xlane.f32.xlu0 %v819
        %v821 = vpop.xlane.xlu0 %820
        %v822 = vsub.f32 %v814, %v821
        %v823 = vmul.f32 %v822, 1.442695
        %v824 = vpow.pop %v823
        %v825 = vsel %vm772, %v824, 0.0
        %826 = vadd.xlane.f32.xlu0 %v825
        %v827 = vpop.xlane.xlu0 %826
        %v828 = vrcp.pop %v827
        %v829 = vmul.f32 %v824, %v828
        %v830 = vpack.c.bf16 %v829, %v829
        %v832 = vsel %vm772, %v830, 0
        %vm834 = vcmask 1043456
        %v836 = vsel %vm834, %v769, 0
        %838 = vmatprep.subr.bf16.mxu0 0
        %839 = vmatpush1.bf16.msra.mxu0 %v836
        %840 = vmatprep.subr.bf16.mxu0 0
        %841 = vmatpush1.bf16.msra.mxu0 0
        %842 = vmatprep.subr.bf16.mxu0 0
        %843 = vmatpush1.bf16.msra.mxu0 0
        %844 = vmatprep.subr.bf16.mxu0 0
        %845 = vmatpush1.bf16.msra.mxu0 0
        %846 = vmatprep.subr.bf16.mxu0 0
        %847 = vmatpush1.bf16.msra.mxu0 0
        %848 = vmatprep.subr.bf16.mxu0 0
        %849 = vmatpush1.bf16.msra.mxu0 0
        %850 = vmatprep.subr.bf16.mxu0 0
        %851 = vmatpush1.bf16.msra.mxu0 0
        %852 = vmatprep.subr.bf16.mxu0 0
        %853 = vmatpush1.bf16.msra.mxu0 0
        %854 = vmatprep.subr.bf16.mxu0 0
        %855 = vmatpush1.bf16.msra.mxu0 0
        %856 = vmatprep.subr.bf16.mxu0 0
        %857 = vmatpush1.bf16.msra.mxu0 0
        %858 = vmatprep.subr.bf16.mxu0 0
        %859 = vmatpush1.bf16.msra.mxu0 0
        %860 = vmatprep.subr.bf16.mxu0 0
        %861 = vmatpush1.bf16.msra.mxu0 0
        %862 = vmatprep.subr.bf16.mxu0 0
        %863 = vmatpush1.bf16.msra.mxu0 0
        %864 = vmatprep.subr.bf16.mxu0 0
        %865 = vmatpush1.bf16.msra.mxu0 0
        %866 = vmatprep.subr.bf16.mxu0 0
        %867 = vmatpush1.bf16.msra.mxu0 0
        %868 = vmatprep.subr.bf16.mxu0 0
        %869 = vmatpush1.bf16.msra.mxu0 0
        %870 = vmatprep.mubr.bf16.mxu0 0
        %871 = vmatmul.mubr.bf16.gmra.mrb[0].mxu0 %v832
        %v872 = vpop.f32.mrb[0].mxu0
        %v873 = vadd.f32 0.0, %v872
        %v874 = vpop.f32.mrb[0].mxu0
        %v875 = vpop.f32.mrb[0].mxu0
        %v876 = vpop.f32.mrb[0].mxu0
        %877 = vdwg.mxu0
        %v878 = vpack.c.bf16 %v873, %v873
        %vm879 = vcmask 60416
        %880 = vst.msk [vmem:[#allocation2] sm:$0xf] %vm879, %v878
        %882 = vrot.lane.b32.xlu0 %v559, 120
        %v883 = vpop.permute.xlu0 %882
        %885 = vrot.lane.b32.xlu0 %v664, 120
        %v886 = vpop.permute.xlu0 %885
        %v888 = vsel %vm772, %v883, 0
        %v891 = vsel %vm772, %v886, 0
        %893 = vmatprep.subr.bf16.mxu0 0
        %894 = vmatpush1.bf16.xpose.msra.mxu0 %v891
        %895 = vmatprep.subr.bf16.mxu0 0
        %896 = vmatpush1.bf16.xpose.msra.mxu0 0
        %897 = vmatprep.subr.bf16.mxu0 0
        %898 = vmatpush1.bf16.xpose.msra.mxu0 0
        %899 = vmatprep.subr.bf16.mxu0 0
        %900 = vmatpush1.bf16.xpose.msra.mxu0 0
        %901 = vmatprep.subr.bf16.mxu0 0
        %902 = vmatpush1.bf16.xpose.msra.mxu0 0
        %903 = vmatprep.subr.bf16.mxu0 0
        %904 = vmatpush1.bf16.xpose.msra.mxu0 0
        %905 = vmatprep.subr.bf16.mxu0 0
        %906 = vmatpush1.bf16.xpose.msra.mxu0 0
        %907 = vmatprep.subr.bf16.mxu0 0
        %908 = vmatpush1.bf16.xpose.msra.mxu0 0
        %909 = vmatprep.subr.bf16.mxu0 0
        %910 = vmatpush1.bf16.xpose.msra.mxu0 0
        %911 = vmatprep.subr.bf16.mxu0 0
        %912 = vmatpush1.bf16.xpose.msra.mxu0 0
        %913 = vmatprep.subr.bf16.mxu0 0
        %914 = vmatpush1.bf16.xpose.msra.mxu0 0
        %915 = vmatprep.subr.bf16.mxu0 0
        %916 = vmatpush1.bf16.xpose.msra.mxu0 0
        %917 = vmatprep.subr.bf16.mxu0 0
        %918 = vmatpush1.bf16.xpose.msra.mxu0 0
        %919 = vmatprep.subr.bf16.mxu0 0
        %920 = vmatpush1.bf16.xpose.msra.mxu0 0
        %921 = vmatprep.subr.bf16.mxu0 0
        %922 = vmatpush1.bf16.xpose.msra.mxu0 0
        %923 = vmatprep.subr.bf16.mxu0 0
        %924 = vmatpush1.bf16.xpose.msra.mxu0 0
        %925 = vmatprep.mubr.bf16.mxu0 0
        %926 = vmatmul.mubr.bf16.gmra.mrb[0].mxu0 %v888
        %v927 = vpop.f32.mrb[0].mxu0
        %v928 = vadd.f32 0.0, %v927
        %v929 = vpop.f32.mrb[0].mxu0
        %v930 = vpop.f32.mrb[0].mxu0
        %v931 = vpop.f32.mrb[0].mxu0
        %932 = vdwg.mxu0
        %v933 = vsel %vm772, %v928, -inf
        %934 = vmax.xlane.f32.xlu0 %v933
        %v935 = vpop.xlane.xlu0 %934
        %v936 = vsub.f32 %v928, %v935
        %v937 = vmul.f32 %v936, 1.442695
        %v938 = vpow.pop %v937
        %v939 = vsel %vm772, %v938, 0.0
        %940 = vadd.xlane.f32.xlu0 %v939
        %v941 = vpop.xlane.xlu0 %940
        %v942 = vrcp.pop %v941
        %v943 = vmul.f32 %v938, %v942
        %v944 = vpack.c.bf16 %v943, %v943
        %946 = vrot.lane.b32.xlu0 %v769, 120
        %v947 = vpop.permute.xlu0 %946
        %v949 = vsel %vm772, %v944, 0
        %v952 = vsel %vm834, %v947, 0
        %954 = vmatprep.subr.bf16.mxu0 0
        %955 = vmatpush1.bf16.msra.mxu0 %v952
        %956 = vmatprep.subr.bf16.mxu0 0
        %957 = vmatpush1.bf16.msra.mxu0 0
        %958 = vmatprep.subr.bf16.mxu0 0
        %959 = vmatpush1.bf16.msra.mxu0 0
        %960 = vmatprep.subr.bf16.mxu0 0
        %961 = vmatpush1.bf16.msra.mxu0 0
        %962 = vmatprep.subr.bf16.mxu0 0
        %963 = vmatpush1.bf16.msra.mxu0 0
        %964 = vmatprep.subr.bf16.mxu0 0
        %965 = vmatpush1.bf16.msra.mxu0 0
        %966 = vmatprep.subr.bf16.mxu0 0
        %967 = vmatpush1.bf16.msra.mxu0 0
        %968 = vmatprep.subr.bf16.mxu0 0
        %969 = vmatpush1.bf16.msra.mxu0 0
        %970 = vmatprep.subr.bf16.mxu0 0
        %971 = vmatpush1.bf16.msra.mxu0 0
        %972 = vmatprep.subr.bf16.mxu0 0
        %973 = vmatpush1.bf16.msra.mxu0 0
        %974 = vmatprep.subr.bf16.mxu0 0
        %975 = vmatpush1.bf16.msra.mxu0 0
        %976 = vmatprep.subr.bf16.mxu0 0
        %977 = vmatpush1.bf16.msra.mxu0 0
        %978 = vmatprep.subr.bf16.mxu0 0
        %979 = vmatpush1.bf16.msra.mxu0 0
        %980 = vmatprep.subr.bf16.mxu0 0
        %981 = vmatpush1.bf16.msra.mxu0 0
        %982 = vmatprep.subr.bf16.mxu0 0
        %983 = vmatpush1.bf16.msra.mxu0 0
        %984 = vmatprep.subr.bf16.mxu0 0
        %985 = vmatpush1.bf16.msra.mxu0 0
        %986 = vmatprep.mubr.bf16.mxu0 0
        %987 = vmatmul.mubr.bf16.gmra.mrb[0].mxu0 %v949
        %v988 = vpop.f32.mrb[0].mxu0
        %v989 = vadd.f32 0.0, %v988
        %v990 = vpop.f32.mrb[0].mxu0
        %v991 = vpop.f32.mrb[0].mxu0
        %v992 = vpop.f32.mrb[0].mxu0
        %993 = vdwg.mxu0
        %v994 = vpack.c.bf16 %v989, %v989
        %v996 = vunpack.c.l.b16 %v994
        %v997 = vpack.c.b16 %v996, %v996
        %998 = vrot.lane.b32.xlu0 %v997, 8
        %v999 = vpop.permute.xlu0 %998
        %vm1001 = vcmask 126016
        %1002 = vst.msk [vmem:[#allocation2] sm:$0xf] %vm1001, %v999
        %1003 = vrot.lane.b32.xlu0 %v559, 112
        %v1004 = vpop.permute.xlu0 %1003
        %1005 = vrot.lane.b32.xlu0 %v664, 112
        %v1006 = vpop.permute.xlu0 %1005
        %v1008 = vsel %vm772, %v1004, 0
        %v1011 = vsel %vm772, %v1006, 0
        %1013 = vmatprep.subr.bf16.mxu0 0
        %1014 = vmatpush1.bf16.xpose.msra.mxu0 %v1011
        %1015 = vmatprep.subr.bf16.mxu0 0
        %1016 = vmatpush1.bf16.xpose.msra.mxu0 0
        %1017 = vmatprep.subr.bf16.mxu0 0
        %1018 = vmatpush1.bf16.xpose.msra.mxu0 0
        %1019 = vmatprep.subr.bf16.mxu0 0
        %1020 = vmatpush1.bf16.xpose.msra.mxu0 0
        %1021 = vmatprep.subr.bf16.mxu0 0
        %1022 = vmatpush1.bf16.xpose.msra.mxu0 0
        %1023 = vmatprep.subr.bf16.mxu0 0
        %1024 = vmatpush1.bf16.xpose.msra.mxu0 0
        %1025 = vmatprep.subr.bf16.mxu0 0
        %1026 = vmatpush1.bf16.xpose.msra.mxu0 0
        %1027 = vmatprep.subr.bf16.mxu0 0
        %1028 = vmatpush1.bf16.xpose.msra.mxu0 0
        %1029 = vmatprep.subr.bf16.mxu0 0
        %1030 = vmatpush1.bf16.xpose.msra.mxu0 0
        %1031 = vmatprep.subr.bf16.mxu0 0
        %1032 = vmatpush1.bf16.xpose.msra.mxu0 0
        %1033 = vmatprep.subr.bf16.mxu0 0
        %1034 = vmatpush1.bf16.xpose.msra.mxu0 0
        %1035 = vmatprep.subr.bf16.mxu0 0
        %1036 = vmatpush1.bf16.xpose.msra.mxu0 0
        %1037 = vmatprep.subr.bf16.mxu0 0
        %1038 = vmatpush1.bf16.xpose.msra.mxu0 0
        %1039 = vmatprep.subr.bf16.mxu0 0
        %1040 = vmatpush1.bf16.xpose.msra.mxu0 0
        %1041 = vmatprep.subr.bf16.mxu0 0
        %1042 = vmatpush1.bf16.xpose.msra.mxu0 0
        %1043 = vmatprep.subr.bf16.mxu0 0
        %1044 = vmatpush1.bf16.xpose.msra.mxu0 0
        %1045 = vmatprep.mubr.bf16.mxu0 0
        %1046 = vmatmul.mubr.bf16.gmra.mrb[0].mxu0 %v1008
        %v1047 = vpop.f32.mrb[0].mxu0
        %v1048 = vadd.f32 0.0, %v1047
        %v1049 = vpop.f32.mrb[0].mxu0
        %v1050 = vpop.f32.mrb[0].mxu0
        %v1051 = vpop.f32.mrb[0].mxu0
        %1052 = vdwg.mxu0
        %v1053 = vsel %vm772, %v1048, -inf
        %1054 = vmax.xlane.f32.xlu0 %v1053
        %v1055 = vpop.xlane.xlu0 %1054
        %v1056 = vsub.f32 %v1048, %v1055
        %v1057 = vmul.f32 %v1056, 1.442695
        %v1058 = vpow.pop %v1057
        %v1059 = vsel %vm772, %v1058, 0.0
        %1060 = vadd.xlane.f32.xlu0 %v1059
        %v1061 = vpop.xlane.xlu0 %1060
        %v1062 = vrcp.pop %v1061
        %v1063 = vmul.f32 %v1058, %v1062
        %v1064 = vpack.c.bf16 %v1063, %v1063
        %1065 = vrot.lane.b32.xlu0 %v769, 112
        %v1066 = vpop.permute.xlu0 %1065
        %v1068 = vsel %vm772, %v1064, 0
        %v1071 = vsel %vm834, %v1066, 0
        %1073 = vmatprep.subr.bf16.mxu0 0
        %1074 = vmatpush1.bf16.msra.mxu0 %v1071
        %1075 = vmatprep.subr.bf16.mxu0 0
        %1076 = vmatpush1.bf16.msra.mxu0 0
        %1077 = vmatprep.subr.bf16.mxu0 0
        %1078 = vmatpush1.bf16.msra.mxu0 0
        %1079 = vmatprep.subr.bf16.mxu0 0
        %1080 = vmatpush1.bf16.msra.mxu0 0
        %1081 = vmatprep.subr.bf16.mxu0 0
        %1082 = vmatpush1.bf16.msra.mxu0 0
        %1083 = vmatprep.subr.bf16.mxu0 0
        %1084 = vmatpush1.bf16.msra.mxu0 0
        %1085 = vmatprep.subr.bf16.mxu0 0
        %1086 = vmatpush1.bf16.msra.mxu0 0
        %1087 = vmatprep.subr.bf16.mxu0 0
        %1088 = vmatpush1.bf16.msra.mxu0 0
        %1089 = vmatprep.subr.bf16.mxu0 0
        %1090 = vmatpush1.bf16.msra.mxu0 0
        %1091 = vmatprep.subr.bf16.mxu0 0
        %1092 = vmatpush1.bf16.msra.mxu0 0
        %1093 = vmatprep.subr.bf16.mxu0 0
        %1094 = vmatpush1.bf16.msra.mxu0 0
        %1095 = vmatprep.subr.bf16.mxu0 0
        %1096 = vmatpush1.bf16.msra.mxu0 0
        %1097 = vmatprep.subr.bf16.mxu0 0
        %1098 = vmatpush1.bf16.msra.mxu0 0
        %1099 = vmatprep.subr.bf16.mxu0 0
        %1100 = vmatpush1.bf16.msra.mxu0 0
        %1101 = vmatprep.subr.bf16.mxu0 0
        %1102 = vmatpush1.bf16.msra.mxu0 0
        %1103 = vmatprep.subr.bf16.mxu0 0
        %1104 = vmatpush1.bf16.msra.mxu0 0
        %1105 = vmatprep.mubr.bf16.mxu0 0
        %1106 = vmatmul.mubr.bf16.gmra.mrb[0].mxu0 %v1068
        %v1107 = vpop.f32.mrb[0].mxu0
        %v1108 = vadd.f32 0.0, %v1107
        %v1109 = vpop.f32.mrb[0].mxu0
        %v1110 = vpop.f32.mrb[0].mxu0
        %v1111 = vpop.f32.mrb[0].mxu0
        %1112 = vdwg.mxu0
        %v1113 = vpack.c.bf16 %v1108, %v1108
        %v1115 = vunpack.c.l.b16 %v1113
        %v1116 = vpack.c.b16 %v1115, %v1115
        %1117 = vrot.lane.b32.xlu0 %v1116, 16
        %v1118 = vpop.permute.xlu0 %1117
        %vm1120 = vcmask 191616
        %1121 = vst.msk [vmem:[#allocation2] sm:$0xf] %vm1120, %v1118
        %1122 = vrot.lane.b32.xlu0 %v559, 104
        %v1123 = vpop.permute.xlu0 %1122
        %1124 = vrot.lane.b32.xlu0 %v664, 104
        %v1125 = vpop.permute.xlu0 %1124
        %v1127 = vsel %vm772, %v1123, 0
        %v1130 = vsel %vm772, %v1125, 0
        %1132 = vmatprep.subr.bf16.mxu0 0
        %1133 = vmatpush1.bf16.xpose.msra.mxu0 %v1130
        %1134 = vmatprep.subr.bf16.mxu0 0
        %1135 = vmatpush1.bf16.xpose.msra.mxu0 0
        %1136 = vmatprep.subr.bf16.mxu0 0
        %1137 = vmatpush1.bf16.xpose.msra.mxu0 0
        %1138 = vmatprep.subr.bf16.mxu0 0
        %1139 = vmatpush1.bf16.xpose.msra.mxu0 0
        %1140 = vmatprep.subr.bf16.mxu0 0
        %1141 = vmatpush1.bf16.xpose.msra.mxu0 0
        %1142 = vmatprep.subr.bf16.mxu0 0
        %1143 = vmatpush1.bf16.xpose.msra.mxu0 0
        %1144 = vmatprep.subr.bf16.mxu0 0
        %1145 = vmatpush1.bf16.xpose.msra.mxu0 0
        %1146 = vmatprep.subr.bf16.mxu0 0
        %1147 = vmatpush1.bf16.xpose.msra.mxu0 0
        %1148 = vmatprep.subr.bf16.mxu0 0
        %1149 = vmatpush1.bf16.xpose.msra.mxu0 0
        %1150 = vmatprep.subr.bf16.mxu0 0
        %1151 = vmatpush1.bf16.xpose.msra.mxu0 0
        %1152 = vmatprep.subr.bf16.mxu0 0
        %1153 = vmatpush1.bf16.xpose.msra.mxu0 0
        %1154 = vmatprep.subr.bf16.mxu0 0
        %1155 = vmatpush1.bf16.xpose.msra.mxu0 0
        %1156 = vmatprep.subr.bf16.mxu0 0
        %1157 = vmatpush1.bf16.xpose.msra.mxu0 0
        %1158 = vmatprep.subr.bf16.mxu0 0
        %1159 = vmatpush1.bf16.xpose.msra.mxu0 0
        %1160 = vmatprep.subr.bf16.mxu0 0
        %1161 = vmatpush1.bf16.xpose.msra.mxu0 0
        %1162 = vmatprep.subr.bf16.mxu0 0
        %1163 = vmatpush1.bf16.xpose.msra.mxu0 0
        %1164 = vmatprep.mubr.bf16.mxu0 0
        %1165 = vmatmul.mubr.bf16.gmra.mrb[0].mxu0 %v1127
        %v1166 = vpop.f32.mrb[0].mxu0
        %v1167 = vadd.f32 0.0, %v1166
        %v1168 = vpop.f32.mrb[0].mxu0
        %v1169 = vpop.f32.mrb[0].mxu0
        %v1170 = vpop.f32.mrb[0].mxu0
        %1171 = vdwg.mxu0
        %v1172 = vsel %vm772, %v1167, -inf
        %1173 = vmax.xlane.f32.xlu0 %v1172
        %v1174 = vpop.xlane.xlu0 %1173
        %v1175 = vsub.f32 %v1167, %v1174
        %v1176 = vmul.f32 %v1175, 1.442695
        %v1177 = vpow.pop %v1176
        %v1178 = vsel %vm772, %v1177, 0.0
        %1179 = vadd.xlane.f32.xlu0 %v1178
        %v1180 = vpop.xlane.xlu0 %1179
        %v1181 = vrcp.pop %v1180
        %v1182 = vmul.f32 %v1177, %v1181
        %v1183 = vpack.c.bf16 %v1182, %v1182
        %1184 = vrot.lane.b32.xlu0 %v769, 104
        %v1185 = vpop.permute.xlu0 %1184
        %v1187 = vsel %vm772, %v1183, 0
        %v1190 = vsel %vm834, %v1185, 0
        %1192 = vmatprep.subr.bf16.mxu0 0
        %1193 = vmatpush1.bf16.msra.mxu0 %v1190
        %1194 = vmatprep.subr.bf16.mxu0 0
        %1195 = vmatpush1.bf16.msra.mxu0 0
        %1196 = vmatprep.subr.bf16.mxu0 0
        %1197 = vmatpush1.bf16.msra.mxu0 0
        %1198 = vmatprep.subr.bf16.mxu0 0
        %1199 = vmatpush1.bf16.msra.mxu0 0
        %1200 = vmatprep.subr.bf16.mxu0 0
        %1201 = vmatpush1.bf16.msra.mxu0 0
        %1202 = vmatprep.subr.bf16.mxu0 0
        %1203 = vmatpush1.bf16.msra.mxu0 0
        %1204 = vmatprep.subr.bf16.mxu0 0
        %1205 = vmatpush1.bf16.msra.mxu0 0
        %1206 = vmatprep.subr.bf16.mxu0 0
        %1207 = vmatpush1.bf16.msra.mxu0 0
        %1208 = vmatprep.subr.bf16.mxu0 0
        %1209 = vmatpush1.bf16.msra.mxu0 0
        %1210 = vmatprep.subr.bf16.mxu0 0
        %1211 = vmatpush1.bf16.msra.mxu0 0
        %1212 = vmatprep.subr.bf16.mxu0 0
        %1213 = vmatpush1.bf16.msra.mxu0 0
        %1214 = vmatprep.subr.bf16.mxu0 0
        %1215 = vmatpush1.bf16.msra.mxu0 0
        %1216 = vmatprep.subr.bf16.mxu0 0
        %1217 = vmatpush1.bf16.msra.mxu0 0
        %1218 = vmatprep.subr.bf16.mxu0 0
        %1219 = vmatpush1.bf16.msra.mxu0 0
        %1220 = vmatprep.subr.bf16.mxu0 0
        %1221 = vmatpush1.bf16.msra.mxu0 0
        %1222 = vmatprep.subr.bf16.mxu0 0
        %1223 = vmatpush1.bf16.msra.mxu0 0
        %1224 = vmatprep.mubr.bf16.mxu0 0
        %1225 = vmatmul.mubr.bf16.gmra.mrb[0].mxu0 %v1187
        %v1226 = vpop.f32.mrb[0].mxu0
        %v1227 = vadd.f32 0.0, %v1226
        %v1228 = vpop.f32.mrb[0].mxu0
        %v1229 = vpop.f32.mrb[0].mxu0
        %v1230 = vpop.f32.mrb[0].mxu0
        %1231 = vdwg.mxu0
        %v1232 = vpack.c.bf16 %v1227, %v1227
        %v1234 = vunpack.c.l.b16 %v1232
        %v1235 = vpack.c.b16 %v1234, %v1234
        %1236 = vrot.lane.b32.xlu0 %v1235, 24
        %v1237 = vpop.permute.xlu0 %1236
        %vm1239 = vcmask 257216
        %1240 = vst.msk [vmem:[#allocation2] sm:$0xf] %vm1239, %v1237
        %v1241 = vld [vmem:[#allocation2] sm:$0xf]
        %v1242 = vld [vmem:[#allocation14] sm:$0xf]
        %v1243 = vld [vmem:[#allocation14 + $0x4] sm:$0xf]
        %v1244 = vld [vmem:[#allocation14 + $0x8] sm:$0xf]
        %v1245 = vld [vmem:[#allocation14 + $0xc] sm:$0xf]
        %v1246 = vld [vmem:[#allocation14 + $0x10] sm:$0xf]
        %v1247 = vld [vmem:[#allocation14 + $0x14] sm:$0xf]
        %v1248 = vld [vmem:[#allocation14 + $0x18] sm:$0xf]
        %v1249 = vld [vmem:[#allocation14 + $0x1c] sm:$0xf]
        %v1250 = vld [vmem:[#allocation14 + $0x20] sm:$0xf]
        %v1251 = vld [vmem:[#allocation14 + $0x24] sm:$0xf]
        %v1252 = vld [vmem:[#allocation14 + $0x28] sm:$0xf]
        %v1253 = vld [vmem:[#allocation14 + $0x2c] sm:$0xf]
        %v1254 = vld [vmem:[#allocation14 + $0x30] sm:$0xf]
        %v1255 = vld [vmem:[#allocation14 + $0x34] sm:$0xf]
        %v1256 = vld [vmem:[#allocation14 + $0x38] sm:$0xf]
        %v1257 = vld [vmem:[#allocation14 + $0x3c] sm:$0xf]
        %v1258 = vld [vmem:[%s7] sm:$0x1]
        %v1260 = vlaneseq
        %v1261 = vshrl.u32 %v1260, 7
        %v1262 = vsub.s32 0, %v1261
        %v1263 = vrot.slane %v1258, %v1262
        %v1281 = vunpack.c.l.b16 %v1242
        %v1282 = vunpack.c.l.b16 %v1243
        %v1283 = vunpack.c.l.b16 %v1244
        %v1284 = vunpack.c.l.b16 %v1245
        %v1285 = vunpack.c.l.b16 %v1246
        %v1286 = vunpack.c.l.b16 %v1247
        %v1287 = vunpack.c.l.b16 %v1248
        %v1288 = vunpack.c.l.b16 %v1249
        %v1289 = vunpack.c.l.b16 %v1250
        %v1290 = vunpack.c.l.b16 %v1251
        %v1291 = vunpack.c.l.b16 %v1252
        %v1292 = vunpack.c.l.b16 %v1253
        %v1293 = vunpack.c.l.b16 %v1254
        %v1294 = vunpack.c.l.b16 %v1255
        %v1295 = vunpack.c.l.b16 %v1256
        %v1296 = vunpack.c.l.b16 %v1257
        %v1297 = vpack.c.b16 %v1282, %v1281
        %v1298 = vpack.c.b16 %v1284, %v1283
        %v1299 = vpack.c.b16 %v1286, %v1285
        %v1300 = vpack.c.b16 %v1288, %v1287
        %v1301 = vpack.c.b16 %v1290, %v1289
        %v1302 = vpack.c.b16 %v1292, %v1291
        %v1303 = vpack.c.b16 %v1294, %v1293
        %v1304 = vpack.c.b16 %v1296, %v1295
        %1313 = vmatprep.subr.bf16.mxu0 0
        %1314 = vmatpush1.bf16.msra.mxu0 %v1297
        %1315 = vmatprep.subr.bf16.mxu0 0
        %1316 = vmatpush1.bf16.msra.mxu0 %v1298
        %1317 = vmatprep.subr.bf16.mxu0 0
        %1318 = vmatpush1.bf16.msra.mxu0 %v1299
        %1319 = vmatprep.subr.bf16.mxu0 0
        %1320 = vmatpush1.bf16.msra.mxu0 %v1300
        %1321 = vmatprep.subr.bf16.mxu0 0
        %1322 = vmatpush1.bf16.msra.mxu0 %v1301
        %1323 = vmatprep.subr.bf16.mxu0 0
        %1324 = vmatpush1.bf16.msra.mxu0 %v1302
        %1325 = vmatprep.subr.bf16.mxu0 0
        %1326 = vmatpush1.bf16.msra.mxu0 %v1303
        %1327 = vmatprep.subr.bf16.mxu0 0
        %1328 = vmatpush1.bf16.msra.mxu0 %v1304
        %1329 = vmatprep.subr.bf16.mxu0 0
        %1330 = vmatpush1.bf16.msra.mxu0 0
        %1331 = vmatprep.subr.bf16.mxu0 0
        %1332 = vmatpush1.bf16.msra.mxu0 0
        %1333 = vmatprep.subr.bf16.mxu0 0
        %1334 = vmatpush1.bf16.msra.mxu0 0
        %1335 = vmatprep.subr.bf16.mxu0 0
        %1336 = vmatpush1.bf16.msra.mxu0 0
        %1337 = vmatprep.subr.bf16.mxu0 0
        %1338 = vmatpush1.bf16.msra.mxu0 0
        %1339 = vmatprep.subr.bf16.mxu0 0
        %1340 = vmatpush1.bf16.msra.mxu0 0
        %1341 = vmatprep.subr.bf16.mxu0 0
        %1342 = vmatpush1.bf16.msra.mxu0 0
        %1343 = vmatprep.subr.bf16.mxu0 0
        %1344 = vmatpush1.bf16.msra.mxu0 0
        %1345 = vmatprep.mubr.bf16.mxu0 0
        %1346 = vmatmul.mubr.bf16.gmra.mrb[0].mxu0 %v1241
        %v1347 = vpop.f32.mrb[0].mxu0
        %v1348 = vadd.f32 %v1263, %v1347
        %v1349 = vpop.f32.mrb[0].mxu0
        %v1350 = vpop.f32.mrb[0].mxu0
        %v1351 = vpop.f32.mrb[0].mxu0
        %1352 = vdwg.mxu0
        %v1353 = vpack.c.bf16 %v1348, %v1348
        %1354 = vst [vmem:[%s449] sm:$0xf] %v1353
        %s1355 = sand.u32 %s221, 1
        %s1356 = scalar_lea.sflag [#allocation5], %s1355
        %s1357 = sand.u32 %s221, 1
        %s1358 = smul.addr %s1357, 4
        %s1359 = scalar_lea.vmem [#allocation15], %s1358
        // Predicated region
        $region81: #{tpu_custom_call.1} parent=51 // pred_check
          %p1360 = pneg %p231
        $region82: #{tpu_custom_call.1} parent=51 // pred_check_branch
          %1362 = sbr.rel (%p1360) target = $region84
        $region83: #{tpu_custom_call.1} parent=51 // pred_region
          %s1364 = ssub.s32 64, 64
          %1365 = vsyncadd %s1356, %s1364
          %s1366 = smul.addr %s30, 64
          %s1367 = scalar_lea.hbm %s8, %s1366
          %s1369 = sshll.u32 %s1359, 4
          %s1370 = int_to_ptr.vmem [resolvable:$true] %s1369
          %1372 = dma.vmem_to_hbm [thread:$0]  %s1370, 64, %s1367, %s1356
        $region84: #{tpu_custom_call.1} parent=51 // pred_fallthru
          _
      $region52: #{tpu_custom_call.1} parent=5 // pred_fallthru
        _
      %p1373 = scmp.le.s32.totalorder 2, %s25
      // Predicated region
      $region85: #{tpu_custom_call.1} parent=5 // pred_check
        %p1374 = pneg %p1373
      $region86: #{tpu_custom_call.1} parent=5 // pred_check_branch
        %1376 = sbr.rel (%p1374) target = $region88
      $region87: #{tpu_custom_call.1} parent=5 // pred_region
        %s1377 = ssub.s32 %s25, 2
        // Predicated region
        $region89: #{tpu_custom_call.1} parent=87 // pred_check
          %p1378 = pneg %p237
        $region90: #{tpu_custom_call.1} parent=87 // pred_check_branch
          %1380 = sbr.rel (%p1378) target = $region92
        $region91: #{tpu_custom_call.1} parent=87 // pred_region
          %s1381 = sand.u32 %s222, 1
          %s1382 = scalar_lea.sflag [#allocation5], %s1381
          %s1383 = sand.u32 %s222, 1
          %s1384 = smul.addr %s1383, 4
          %s1385 = scalar_lea.vmem [#allocation15], %s1384
          %1386 = dma.done %s1382, 64
        $region92: #{tpu_custom_call.1} parent=87 // pred_fallthru
          _
      $region88: #{tpu_custom_call.1} parent=5 // pred_fallthru
        _
    $region6: #{tpu_custom_call.1} parent=1 // loop_footer
      %s29 = sadd.s32 1, %s25
    $region7: #{tpu_custom_call.1} parent=1 // loop_footer_branch
      %24 = sbr.rel target = $region3
    $region8: #{tpu_custom_call.1} parent=1 // loop_exit
      _
    %1387 = vsyncpa [#allocation4], 1
    %s1388 = scalar_lea.sflag [#allocation4], 1
    %1389 = vsyncpa %s1388, 1
    %1390 = vsyncpa [#allocation7], 1
    %s1391 = scalar_lea.sflag [#allocation7], 1
    %1392 = vsyncpa %s1391, 1
    %1393 = vsyncpa [#allocation10], 1
    %1394 = vsyncpa [#allocation13], 1
    %1395 = vsyncpa [#allocation5], 1
    %s1396 = scalar_lea.sflag [#allocation5], 1
    %1397 = vsyncpa %s1396, 1

</llo_original>
